<compile_context>
chip_gen: v7x
topology: tpu7x:2x2x1
jax: 0.10.0
libtpu: 0.0.40
codegen_flags: <defaults>
</compile_context>

<pallas_src>
import math

import jax
import jax.numpy as jnp
from jax.experimental import pallas as pl
from jax.experimental.pallas import tpu as pltpu

KERNEL_SIZE = 3          # cv2 d=3 -> radius 1 -> cross support (diagonals dropped)
SIGMA_SPACE = 50.0
SIGMA_COLOR = 2.0
DOWNSAMPLE = 16
TILE_ROWS = 128          # TH: fixed row-tile height (THo = 8 output rows per tile)

# Python-float constants (module scope, never traced).
_SPACE_W = math.exp(-0.5 / (SIGMA_SPACE * SIGMA_SPACE))   # spatial weight at dist^2 == 1
_INV_SPACE_W = 1.0 / _SPACE_W
_COLOR_COEFF = -0.5 / (SIGMA_COLOR * SIGMA_COLOR)
_INV_POOL = 1.0 / (DOWNSAMPLE * DOWNSAMPLE)                # 1/256, exact in bf16

# deterministic "parameter" of the module (unused in forward, like in PyTorch)
DUMMY_PARAMETER = jnp.zeros((1,), jnp.float32)


def _edge_preserve_kernel(x_ref, halo_ref, pcol_ref, o_ref):
    # x_ref:    (1, TH, W)   f32  row tile of the (row-padded) image
    # halo_ref: (1, 1, 2, W) f32  row above / row below this tile (reflect_101)
    # pcol_ref: (W, Wo)      bf16 column-pooling indicators * 1/256 (resident)
    # o_ref:    (1, THo, Wo) f32
    x = x_ref[0]                                    # (TH, W)
    TH, W = x.shape
    halo = halo_ref[0, 0]                           # (2, W)
    up_row = halo[0:1, :]                           # neighbour above row 0
    dn_row = halo[1:2, :]                           # neighbour below row TH-1

    cc = _COLOR_COEFF
    inv_ws = _INV_SPACE_W

    # ---- accumulate num/den with *wrapped* shifts: zero full-tile selects --------
    num = x * inv_ws                                # spatial weight folded into init
    den = jnp.full_like(x, inv_ws)

    n_up = pltpu.roll(x, shift=1, axis=0)           # row above (row 0 wraps)
    d_up = x - n_up
    w_up = jnp.exp(cc * (d_up * d_up))              # full-tile exp #1
    num = num + w_up * n_up
    den = den + w_up

    n_dn = pltpu.roll(x, shift=TH - 1, axis=0)      # row below (row TH-1 wraps)
    w_dn = pltpu.roll(w_up, shift=TH - 1, axis=0)   # w_down[r] == w_up[r+1] (symmetry)
    num = num + w_dn * n_dn
    den = den + w_dn

    n_lf = pltpu.roll(x, shift=1, axis=1)           # col j-1 (col 0 wraps), lane roll
    d_lf = x - n_lf
    wh = jnp.exp(cc * (d_lf * d_lf))                # full-tile exp #2
    num = num + wh * n_lf
    den = den + wh

    n_rt = pltpu.roll(x, shift=W - 1, axis=1)       # col j+1 (col W-1 wraps)
    w_rt = pltpu.roll(wh, shift=W - 1, axis=1)      # w_right[:, j] == wh[:, j+1]
    num = num + w_rt * n_rt
    den = den + w_rt

    filtered = num * pl.reciprocal(den, approx=True)     # den > 1, approx is safe

    # ---- O(TH + W) exact boundary (reflect_101) corrections -----------------------
    # Only four taps are wrong: the up-tap in row 0, the down-tap in row TH-1, the
    # left-tap in col 0 and the right-tap in col W-1.  Build additive num/den
    # corrections for those strips, re-divide exactly, and fold the differences into
    # the pooled row sums below (so the wrapped full-tile value cancels out).
    x_top, x_bot = x[0:1, :], x[TH - 1:TH, :]              # (1, W)
    w_wrapv = w_up[0:1, :]                                 # g(x[0]-x[TH-1]), used twice
    g_top = jnp.exp(cc * (x_top - up_row) ** 2)            # correct up-weight, row 0
    g_bot = jnp.exp(cc * (x_bot - dn_row) ** 2)            # correct down-weight, row TH-1
    aN_up, aD_up = g_top * up_row - w_wrapv * x_bot, g_top - w_wrapv
    aN_dn, aD_dn = g_bot * dn_row - w_wrapv * x_top, g_bot - w_wrapv

    x_l0, x_l1 = x[:, 0:1], x[:, 1:2]                      # (TH, 1)
    x_r0, x_r1 = x[:, W - 1:W], x[:, W - 2:W - 1]
    w_wraph = wh[:, 0:1]                                   # g(x[:,0]-x[:,W-1])
    aN_lf, aD_lf = wh[:, 1:2] * x_l1 - w_wraph * x_r0, wh[:, 1:2] - w_wraph
    aN_rt, aD_rt = wh[:, W - 1:W] * x_r1 - w_wraph * x_l0, wh[:, W - 1:W] - w_wraph

    colv = jax.lax.broadcasted_iota(jnp.int32, (1, W), 1)
    rowv = jax.lax.broadcasted_iota(jnp.int32, (TH, 1), 0)
    col0_m, colL_m = colv == 0, colv == W - 1              # hoisted boundary masks

    def _exact_row(n_row, d_row, aN_v, aD_v, r):
        # exact filtered value of tile-row r (its two corner columns included)
        n_row = (n_row + aN_v + jnp.where(col0_m, aN_lf[r:r + 1, :], 0.0)
                 + jnp.where(colL_m, aN_rt[r:r + 1, :], 0.0))
        d_row = (d_row + aD_v + jnp.where(col0_m, aD_lf[r:r + 1, :], 0.0)
                 + jnp.where(colL_m, aD_rt[r:r + 1, :], 0.0))
        return n_row / d_row

    dr0 = _exact_row(num[0:1, :], den[0:1, :], aN_up, aD_up, 0) - filtered[0:1, :]
    drL = (_exact_row(num[TH - 1:TH, :], den[TH - 1:TH, :], aN_dn, aD_dn, TH - 1)
           - filtered[TH - 1:TH, :])

    interior = jnp.logical_and(rowv > 0, rowv < TH - 1)    # corners handled above
    dc0 = jnp.where(interior,
                    (num[:, 0:1] + aN_lf) / (den[:, 0:1] + aD_lf) - filtered[:, 0:1],
                    0.0)                                   # (TH, 1)
    dcL = jnp.where(interior,
                    (num[:, W - 1:W] + aN_rt) / (den[:, W - 1:W] + aD_rt)
                    - filtered[:, W - 1:W],
                    0.0)

    # ---- 16x16 average pool: row-group sums (VPU) + resident bf16 matmul (MXU) ----
    THo = TH // DOWNSAMPLE
    rowsum = jnp.sum(filtered.reshape(THo, DOWNSAMPLE, W), axis=1)       # (THo, W)
    s0 = jnp.sum(dc0.reshape(THo, DOWNSAMPLE, 1), axis=1)                # (THo, 1)
    sL = jnp.sum(dcL.reshape(THo, DOWNSAMPLE, 1), axis=1)
    rgrp = jax.lax.broadcasted_iota(jnp.int32, (THo, 1), 0)
    rowsum = (rowsum                                                      # tiny fixes
              + jnp.where(rgrp == 0, dr0, 0.0)
              + jnp.where(rgrp == THo - 1, drL, 0.0)
              + jnp.where(col0_m, s0, 0.0)
              + jnp.where(colL_m, sL, 0.0))

    o_ref[0] = jnp.dot(rowsum.astype(jnp.bfloat16), pcol_ref[...],
                       preferred_element_type=jnp.float32)


def _grid_and_maps(B, nH):
    # Put the larger parallel axis first (helps the 2-TensorCore split on v7x).
    if nH >= B:
        grid = (nH, B)
        img = lambda h, b: (b, h, 0)
        hal = lambda h, b: (b, h, 0, 0)
        pcl = lambda h, b: (0, 0)
        out = lambda h, b: (b, h, 0)
    else:
        grid = (B, nH)
        img = lambda b, h: (b, h, 0)
        hal = lambda b, h: (b, h, 0, 0)
        pcl = lambda b, h: (0, 0)
        out = lambda b, h: (b, h, 0)
    return grid, img, hal, pcl, out


def edge_preserve(x):
    """x: (B, 1, H, W) float32 -> (B, 1, H//16, W//16) float32."""
    B, C, H, W = x.shape
    assert C == 1, "module squeezes a single channel per sample"
    assert H % DOWNSAMPLE == 0 and W % DOWNSAMPLE == 0
    assert H >= 2 and W >= 2
    Ho, Wo = H // DOWNSAMPLE, W // DOWNSAMPLE

    x2 = x.reshape(B, H, W).astype(jnp.float32)

    TH = TILE_ROWS
    nH = -(-H // TH)
    Hp = nH * TH
    if Hp > H:
        # Row-pad so tiling always applies (no whole-image fallback).  The first pad
        # row is the reflect_101 neighbour (row H-2) of the last real row; the rest
        # never influence the kept (cropped) output rows.
        pad = jnp.broadcast_to(x2[:, H - 2:H - 1, :], (B, Hp - H, W))
        x2p = jnp.concatenate([x2, pad], axis=1)
    else:
        x2p = x2
    THo = TH // DOWNSAMPLE
    Hpo = Hp // DOWNSAMPLE

    # One halo row above / below each row-tile (BORDER_REFLECT_101 at image edges).
    up_idx = jnp.array([1] + [h * TH - 1 for h in range(1, nH)], dtype=jnp.int32)
    dn_idx = jnp.array([h * TH + TH for h in range(nH - 1)] + [Hp - 2], dtype=jnp.int32)
    halos = jnp.stack([x2p[:, up_idx, :], x2p[:, dn_idx, :]], axis=2)   # (B, nH, 2, W)

    # Column-pooling indicator matrix with the 1/256 normalisation folded in, stored
    # in bf16 (1/256 is exact) so the resident block is half the VMEM and the MXU
    # runs its native single-pass bf16 path.  Built once here, kept resident.
    col_pix = jnp.arange(W, dtype=jnp.int32)[:, None] // DOWNSAMPLE
    col_blk = jnp.arange(Wo, dtype=jnp.int32)[None, :]
    pool_col = jnp.where(col_pix == col_blk, _INV_POOL, 0.0).astype(jnp.bfloat16)

    grid, img_map, halo_map, pcol_map, out_map = _grid_and_maps(B, nH)

    out = pl.pallas_call(
        _edge_preserve_kernel,
        out_shape=jax.ShapeDtypeStruct((B, Hpo, Wo), jnp.float32),
        grid_spec=pltpu.PrefetchScalarGridSpec(
            num_scalar_prefetch=0,
            grid=grid,
            in_specs=[
                pl.BlockSpec((1, TH, W), img_map),
                pl.BlockSpec((1, 1, 2, W), halo_map),
                pl.BlockSpec((W, Wo), pcol_map),
            ],
            out_specs=pl.BlockSpec((1, THo, Wo), out_map),
        ),
        compiler_params=pltpu.CompilerParams(
            dimension_semantics=("parallel", "parallel"),
            vmem_limit_bytes=48 * 1024 * 1024,
        ),
    )(x2p, halos, pool_col)

    return out[:, :Ho, :].reshape(B, 1, Ho, Wo)


def _reference(x):
    """Pure-JAX reference (concatenate-based shifts, exact division)."""
    B, C, H, W = x.shape
    x2 = x.reshape(B, H, W).astype(jnp.float32)
    n_up = jnp.concatenate([x2[:, 1:2, :], x2[:, :H - 1, :]], axis=1)
    n_dn = jnp.concatenate([x2[:, 1:, :], x2[:, H - 2:H - 1, :]], axis=1)
    n_lf = jnp.concatenate([x2[:, :, 1:2], x2[:, :, :W - 1]], axis=2)
    n_rt = jnp.concatenate([x2[:, :, 1:], x2[:, :, W - 2:W - 1]], axis=2)
    num = x2
    den = jnp.ones_like(x2)
    for nb in (n_up, n_dn, n_lf, n_rt):
        d = x2 - nb
        w = _SPACE_W * jnp.exp(_COLOR_COEFF * d * d)
        num = num + w * nb
        den = den + w
    filt = num / den
    pooled = filt.reshape(B, H // DOWNSAMPLE, DOWNSAMPLE,
                          W // DOWNSAMPLE, DOWNSAMPLE).mean(axis=(2, 4))
    return pooled.reshape(B, 1, H // DOWNSAMPLE, W // DOWNSAMPLE)


if __name__ == "__main__":
    key = jax.random.PRNGKey(0)
    shapes = [
        (2, 1, 32, 32),     # single (padded) row tile, Ho = Wo = 2
        (1, 1, 256, 64),    # two row tiles: exercises the inter-tile halos
        (1, 1, 160, 32),    # row padding (160 -> 256) + crop of the pooled rows
    ]
    for shp in shapes:
        key, sub = jax.random.split(key)
        x = jax.random.uniform(sub, shp, dtype=jnp.float32)
        y = jax.block_until_ready(edge_preserve(x))
        B, _, H, W = shp
        assert y.shape == (B, 1, H // DOWNSAMPLE, W // DOWNSAMPLE), y.shape
        assert y.dtype == jnp.float32
        y_ref = jax.block_until_ready(_reference(x))
        err = float(jnp.max(jnp.abs(y - y_ref)))
        assert err < 5e-3, f"shape {shp}: max abs err vs reference: {err}"
    print("KERNEL_OK")
</pallas_src>

<mosaic_0001>
module attributes {stable_mosaic.version = 11 : i64} {
  func.func @_edge_preserve_kernel(%arg0: i32, %arg1: i32, %arg2: memref<1x128x32xf32, #tpu.memory_space<vmem>>, %arg3: memref<1x1x2x32xf32, #tpu.memory_space<vmem>>, %arg4: memref<32x2xbf16, #tpu.memory_space<vmem>>, %arg5: memref<1x8x2xf32, #tpu.memory_space<vmem>>) attributes {dimension_semantics = [#tpu.dimension_semantics<parallel>, #tpu.dimension_semantics<parallel>], iteration_bounds = array<i64: 2, 1>, scalar_prefetch = 0 : i64, scratch_operands = 0 : i64, tpu.core_type = #tpu.core_type<tc>, window_params = [{transform_indices = @transform_0, window_bounds = array<i64: 1, 128, 32>}, {transform_indices = @transform_1, window_bounds = array<i64: 1, 1, 2, 32>}, {pipeline_mode = #tpu.pipeline_mode<synchronous>, transform_indices = @transform_2, window_bounds = array<i64: 32, 2>}, {transform_indices = @transform_3, window_bounds = array<i64: 1, 8, 2>}]} {
    %c0 = arith.constant 0 : index
    %c0_0 = arith.constant 0 : index
    %c0_1 = arith.constant 0 : index
    %0 = vector.load %arg2[%c0, %c0_0, %c0_1] : memref<1x128x32xf32, #tpu.memory_space<vmem>>, vector<1x128x32xf32>
    %1 = vector.shape_cast %0 : vector<1x128x32xf32> to vector<128x32xf32>
    %c0_2 = arith.constant 0 : index
    %c0_3 = arith.constant 0 : index
    %c0_4 = arith.constant 0 : index
    %c0_5 = arith.constant 0 : index
    %2 = vector.load %arg3[%c0_2, %c0_3, %c0_4, %c0_5] : memref<1x1x2x32xf32, #tpu.memory_space<vmem>>, vector<1x1x2x32xf32>
    %3 = vector.shape_cast %2 : vector<1x1x2x32xf32> to vector<2x32xf32>
    %4 = vector.extract_strided_slice %3 {offsets = [0, 0], sizes = [1, 32], strides = [1, 1]} : vector<2x32xf32> to vector<1x32xf32>
    %5 = vector.extract_strided_slice %3 {offsets = [1, 0], sizes = [1, 32], strides = [1, 1]} : vector<2x32xf32> to vector<1x32xf32>
    %cst = arith.constant 1.000200e+00 : f32
    %6 = vector.broadcast %cst : f32 to vector<128x32xf32>
    %7 = arith.mulf %1, %6 : vector<128x32xf32>
    %cst_6 = arith.constant 1.000200e+00 : f32
    %8 = vector.broadcast %cst_6 : f32 to vector<128x32xf32>
    %c1_i32 = arith.constant 1 : i32
    %9 = tpu.dynamic_rotate %1 by %c1_i32 dim 0 : vector<128x32xf32>, i32 -> vector<128x32xf32>
    %10 = arith.subf %1, %9 : vector<128x32xf32>
    %11 = arith.mulf %10, %10 : vector<128x32xf32>
    %cst_7 = arith.constant -1.250000e-01 : f32
    %12 = vector.broadcast %cst_7 : f32 to vector<128x32xf32>
    %13 = arith.mulf %12, %11 : vector<128x32xf32>
    %14 = math.exp %13 : vector<128x32xf32>
    %15 = arith.mulf %14, %9 : vector<128x32xf32>
    %16 = arith.addf %7, %15 : vector<128x32xf32>
    %17 = arith.addf %8, %14 : vector<128x32xf32>
    %c127_i32 = arith.constant 127 : i32
    %18 = tpu.dynamic_rotate %1 by %c127_i32 dim 0 : vector<128x32xf32>, i32 -> vector<128x32xf32>
    %c127_i32_8 = arith.constant 127 : i32
    %19 = tpu.dynamic_rotate %14 by %c127_i32_8 dim 0 : vector<128x32xf32>, i32 -> vector<128x32xf32>
    %20 = arith.mulf %19, %18 : vector<128x32xf32>
    %21 = arith.addf %16, %20 : vector<128x32xf32>
    %22 = arith.addf %17, %19 : vector<128x32xf32>
    %c1_i32_9 = arith.constant 1 : i32
    %23 = tpu.dynamic_rotate %1 by %c1_i32_9 dim 1 : vector<128x32xf32>, i32 -> vector<128x32xf32>
    %24 = arith.subf %1, %23 : vector<128x32xf32>
    %25 = arith.mulf %24, %24 : vector<128x32xf32>
    %cst_10 = arith.constant -1.250000e-01 : f32
    %26 = vector.broadcast %cst_10 : f32 to vector<128x32xf32>
    %27 = arith.mulf %26, %25 : vector<128x32xf32>
    %28 = math.exp %27 : vector<128x32xf32>
    %29 = arith.mulf %28, %23 : vector<128x32xf32>
    %30 = arith.addf %21, %29 : vector<128x32xf32>
    %31 = arith.addf %22, %28 : vector<128x32xf32>
    %c31_i32 = arith.constant 31 : i32
    %32 = tpu.dynamic_rotate %1 by %c31_i32 dim 1 : vector<128x32xf32>, i32 -> vector<128x32xf32>
    %c31_i32_11 = arith.constant 31 : i32
    %33 = tpu.dynamic_rotate %28 by %c31_i32_11 dim 1 : vector<128x32xf32>, i32 -> vector<128x32xf32>
    %34 = arith.mulf %33, %32 : vector<128x32xf32>
    %35 = arith.addf %30, %34 : vector<128x32xf32>
    %36 = arith.addf %31, %33 : vector<128x32xf32>
    %37 = tpu.reciprocal %36 {approx = true} : vector<128x32xf32> -> vector<128x32xf32>
    %38 = arith.mulf %35, %37 : vector<128x32xf32>
    %39 = vector.extract_strided_slice %1 {offsets = [0, 0], sizes = [1, 32], strides = [1, 1]} : vector<128x32xf32> to vector<1x32xf32>
    %40 = vector.extract_strided_slice %1 {offsets = [127, 0], sizes = [1, 32], strides = [1, 1]} : vector<128x32xf32> to vector<1x32xf32>
    %41 = vector.extract_strided_slice %14 {offsets = [0, 0], sizes = [1, 32], strides = [1, 1]} : vector<128x32xf32> to vector<1x32xf32>
    %42 = arith.subf %39, %4 : vector<1x32xf32>
    %43 = arith.mulf %42, %42 : vector<1x32xf32>
    %cst_12 = arith.constant -1.250000e-01 : f32
    %44 = vector.broadcast %cst_12 : f32 to vector<1x32xf32>
    %45 = arith.mulf %44, %43 : vector<1x32xf32>
    %46 = math.exp %45 : vector<1x32xf32>
    %47 = arith.subf %40, %5 : vector<1x32xf32>
    %48 = arith.mulf %47, %47 : vector<1x32xf32>
    %cst_13 = arith.constant -1.250000e-01 : f32
    %49 = vector.broadcast %cst_13 : f32 to vector<1x32xf32>
    %50 = arith.mulf %49, %48 : vector<1x32xf32>
    %51 = math.exp %50 : vector<1x32xf32>
    %52 = arith.mulf %46, %4 : vector<1x32xf32>
    %53 = arith.mulf %41, %40 : vector<1x32xf32>
    %54 = arith.subf %52, %53 : vector<1x32xf32>
    %55 = arith.subf %46, %41 : vector<1x32xf32>
    %56 = arith.mulf %51, %5 : vector<1x32xf32>
    %57 = arith.mulf %41, %39 : vector<1x32xf32>
    %58 = arith.subf %56, %57 : vector<1x32xf32>
    %59 = arith.subf %51, %41 : vector<1x32xf32>
    %60 = vector.extract_strided_slice %1 {offsets = [0, 0], sizes = [128, 1], strides = [1, 1]} : vector<128x32xf32> to vector<128x1xf32>
    %61 = vector.extract_strided_slice %1 {offsets = [0, 1], sizes = [128, 1], strides = [1, 1]} : vector<128x32xf32> to vector<128x1xf32>
    %62 = vector.extract_strided_slice %1 {offsets = [0, 31], sizes = [128, 1], strides = [1, 1]} : vector<128x32xf32> to vector<128x1xf32>
    %63 = vector.extract_strided_slice %1 {offsets = [0, 30], sizes = [128, 1], strides = [1, 1]} : vector<128x32xf32> to vector<128x1xf32>
    %64 = vector.extract_strided_slice %28 {offsets = [0, 0], sizes = [128, 1], strides = [1, 1]} : vector<128x32xf32> to vector<128x1xf32>
    %65 = vector.extract_strided_slice %28 {offsets = [0, 1], sizes = [128, 1], strides = [1, 1]} : vector<128x32xf32> to vector<128x1xf32>
    %66 = arith.mulf %65, %61 : vector<128x1xf32>
    %67 = arith.mulf %64, %62 : vector<128x1xf32>
    %68 = arith.subf %66, %67 : vector<128x1xf32>
    %69 = vector.extract_strided_slice %28 {offsets = [0, 1], sizes = [128, 1], strides = [1, 1]} : vector<128x32xf32> to vector<128x1xf32>
    %70 = arith.subf %69, %64 : vector<128x1xf32>
    %71 = vector.extract_strided_slice %28 {offsets = [0, 31], sizes = [128, 1], strides = [1, 1]} : vector<128x32xf32> to vector<128x1xf32>
    %72 = arith.mulf %71, %63 : vector<128x1xf32>
    %73 = arith.mulf %64, %60 : vector<128x1xf32>
    %74 = arith.subf %72, %73 : vector<128x1xf32>
    %75 = vector.extract_strided_slice %28 {offsets = [0, 31], sizes = [128, 1], strides = [1, 1]} : vector<128x32xf32> to vector<128x1xf32>
    %76 = arith.subf %75, %64 : vector<128x1xf32>
    %77 = tpu.iota {dimensions = array<i32: 1>} : vector<1x32xi32>
    %78 = tpu.iota {dimensions = array<i32: 0>} : vector<128x1xi32>
    %c0_i32 = arith.constant 0 : i32
    %79 = vector.broadcast %c0_i32 : i32 to vector<1x32xi32>
    %80 = arith.cmpi eq, %77, %79 : vector<1x32xi32>
    %c31_i32_14 = arith.constant 31 : i32
    %81 = vector.broadcast %c31_i32_14 : i32 to vector<1x32xi32>
    %82 = arith.cmpi eq, %77, %81 : vector<1x32xi32>
    %83 = vector.extract_strided_slice %35 {offsets = [0, 0], sizes = [1, 32], strides = [1, 1]} : vector<128x32xf32> to vector<1x32xf32>
    %84 = vector.extract_strided_slice %36 {offsets = [0, 0], sizes = [1, 32], strides = [1, 1]} : vector<128x32xf32> to vector<1x32xf32>
    %85 = arith.addf %83, %54 : vector<1x32xf32>
    %86 = vector.extract_strided_slice %68 {offsets = [0, 0], sizes = [1, 1], strides = [1, 1]} : vector<128x1xf32> to vector<1x1xf32>
    %cst_15 = arith.constant 0.000000e+00 : f32
    %87 = vector.shape_cast %86 : vector<1x1xf32> to vector<1x1xf32>
    %88 = vector.broadcast %87 : vector<1x1xf32> to vector<1x32xf32>
    %89 = vector.broadcast %cst_15 : f32 to vector<1x32xf32>
    %90 = arith.select %80, %88, %89 : vector<1x32xi1>, vector<1x32xf32>
    %91 = arith.addf %85, %90 : vector<1x32xf32>
    %92 = vector.extract_strided_slice %74 {offsets = [0, 0], sizes = [1, 1], strides = [1, 1]} : vector<128x1xf32> to vector<1x1xf32>
    %cst_16 = arith.constant 0.000000e+00 : f32
    %93 = vector.shape_cast %92 : vector<1x1xf32> to vector<1x1xf32>
    %94 = vector.broadcast %93 : vector<1x1xf32> to vector<1x32xf32>
    %95 = vector.broadcast %cst_16 : f32 to vector<1x32xf32>
    %96 = arith.select %82, %94, %95 : vector<1x32xi1>, vector<1x32xf32>
    %97 = arith.addf %91, %96 : vector<1x32xf32>
    %98 = arith.addf %84, %55 : vector<1x32xf32>
    %99 = vector.extract_strided_slice %70 {offsets = [0, 0], sizes = [1, 1], strides = [1, 1]} : vector<128x1xf32> to vector<1x1xf32>
    %cst_17 = arith.constant 0.000000e+00 : f32
    %100 = vector.shape_cast %99 : vector<1x1xf32> to vector<1x1xf32>
    %101 = vector.broadcast %100 : vector<1x1xf32> to vector<1x32xf32>
    %102 = vector.broadcast %cst_17 : f32 to vector<1x32xf32>
    %103 = arith.select %80, %101, %102 : vector<1x32xi1>, vector<1x32xf32>
    %104 = arith.addf %98, %103 : vector<1x32xf32>
    %105 = vector.extract_strided_slice %76 {offsets = [0, 0], sizes = [1, 1], strides = [1, 1]} : vector<128x1xf32> to vector<1x1xf32>
    %cst_18 = arith.constant 0.000000e+00 : f32
    %106 = vector.shape_cast %105 : vector<1x1xf32> to vector<1x1xf32>
    %107 = vector.broadcast %106 : vector<1x1xf32> to vector<1x32xf32>
    %108 = vector.broadcast %cst_18 : f32 to vector<1x32xf32>
    %109 = arith.select %82, %107, %108 : vector<1x32xi1>, vector<1x32xf32>
    %110 = arith.addf %104, %109 : vector<1x32xf32>
    %111 = arith.divf %97, %110 : vector<1x32xf32>
    %112 = vector.extract_strided_slice %38 {offsets = [0, 0], sizes = [1, 32], strides = [1, 1]} : vector<128x32xf32> to vector<1x32xf32>
    %113 = arith.subf %111, %112 : vector<1x32xf32>
    %114 = vector.extract_strided_slice %35 {offsets = [127, 0], sizes = [1, 32], strides = [1, 1]} : vector<128x32xf32> to vector<1x32xf32>
    %115 = vector.extract_strided_slice %36 {offsets = [127, 0], sizes = [1, 32], strides = [1, 1]} : vector<128x32xf32> to vector<1x32xf32>
    %116 = arith.addf %114, %58 : vector<1x32xf32>
    %117 = vector.extract_strided_slice %68 {offsets = [127, 0], sizes = [1, 1], strides = [1, 1]} : vector<128x1xf32> to vector<1x1xf32>
    %cst_19 = arith.constant 0.000000e+00 : f32
    %118 = vector.shape_cast %117 : vector<1x1xf32> to vector<1x1xf32>
    %119 = vector.broadcast %118 : vector<1x1xf32> to vector<1x32xf32>
    %120 = vector.broadcast %cst_19 : f32 to vector<1x32xf32>
    %121 = arith.select %80, %119, %120 : vector<1x32xi1>, vector<1x32xf32>
    %122 = arith.addf %116, %121 : vector<1x32xf32>
    %123 = vector.extract_strided_slice %74 {offsets = [127, 0], sizes = [1, 1], strides = [1, 1]} : vector<128x1xf32> to vector<1x1xf32>
    %cst_20 = arith.constant 0.000000e+00 : f32
    %124 = vector.shape_cast %123 : vector<1x1xf32> to vector<1x1xf32>
    %125 = vector.broadcast %124 : vector<1x1xf32> to vector<1x32xf32>
    %126 = vector.broadcast %cst_20 : f32 to vector<1x32xf32>
    %127 = arith.select %82, %125, %126 : vector<1x32xi1>, vector<1x32xf32>
    %128 = arith.addf %122, %127 : vector<1x32xf32>
    %129 = arith.addf %115, %59 : vector<1x32xf32>
    %130 = vector.extract_strided_slice %70 {offsets = [127, 0], sizes = [1, 1], strides = [1, 1]} : vector<128x1xf32> to vector<1x1xf32>
    %cst_21 = arith.constant 0.000000e+00 : f32
    %131 = vector.shape_cast %130 : vector<1x1xf32> to vector<1x1xf32>
    %132 = vector.broadcast %131 : vector<1x1xf32> to vector<1x32xf32>
    %133 = vector.broadcast %cst_21 : f32 to vector<1x32xf32>
    %134 = arith.select %80, %132, %133 : vector<1x32xi1>, vector<1x32xf32>
    %135 = arith.addf %129, %134 : vector<1x32xf32>
    %136 = vector.extract_strided_slice %76 {offsets = [127, 0], sizes = [1, 1], strides = [1, 1]} : vector<128x1xf32> to vector<1x1xf32>
    %cst_22 = arith.constant 0.000000e+00 : f32
    %137 = vector.shape_cast %136 : vector<1x1xf32> to vector<1x1xf32>
    %138 = vector.broadcast %137 : vector<1x1xf32> to vector<1x32xf32>
    %139 = vector.broadcast %cst_22 : f32 to vector<1x32xf32>
    %140 = arith.select %82, %138, %139 : vector<1x32xi1>, vector<1x32xf32>
    %141 = arith.addf %135, %140 : vector<1x32xf32>
    %142 = arith.divf %128, %141 : vector<1x32xf32>
    %143 = vector.extract_strided_slice %38 {offsets = [127, 0], sizes = [1, 32], strides = [1, 1]} : vector<128x32xf32> to vector<1x32xf32>
    %144 = arith.subf %142, %143 : vector<1x32xf32>
    %c0_i32_23 = arith.constant 0 : i32
    %145 = vector.broadcast %c0_i32_23 : i32 to vector<128x1xi32>
    %146 = arith.cmpi sgt, %78, %145 : vector<128x1xi32>
    %c127_i32_24 = arith.constant 127 : i32
    %147 = vector.broadcast %c127_i32_24 : i32 to vector<128x1xi32>
    %148 = arith.cmpi slt, %78, %147 : vector<128x1xi32>
    %149 = arith.andi %146, %148 : vector<128x1xi1>
    %150 = vector.extract_strided_slice %35 {offsets = [0, 0], sizes = [128, 1], strides = [1, 1]} : vector<128x32xf32> to vector<128x1xf32>
    %151 = arith.addf %150, %68 : vector<128x1xf32>
    %152 = vector.extract_strided_slice %36 {offsets = [0, 0], sizes = [128, 1], strides = [1, 1]} : vector<128x32xf32> to vector<128x1xf32>
    %153 = arith.addf %152, %70 : vector<128x1xf32>
    %154 = arith.divf %151, %153 : vector<128x1xf32>
    %155 = vector.extract_strided_slice %38 {offsets = [0, 0], sizes = [128, 1], strides = [1, 1]} : vector<128x32xf32> to vector<128x1xf32>
    %156 = arith.subf %154, %155 : vector<128x1xf32>
    %cst_25 = arith.constant 0.000000e+00 : f32
    %157 = vector.broadcast %cst_25 : f32 to vector<128x1xf32>
    %158 = arith.select %149, %156, %157 : vector<128x1xi1>, vector<128x1xf32>
    %159 = vector.extract_strided_slice %35 {offsets = [0, 31], sizes = [128, 1], strides = [1, 1]} : vector<128x32xf32> to vector<128x1xf32>
    %160 = arith.addf %159, %74 : vector<128x1xf32>
    %161 = vector.extract_strided_slice %36 {offsets = [0, 31], sizes = [128, 1], strides = [1, 1]} : vector<128x32xf32> to vector<128x1xf32>
    %162 = arith.addf %161, %76 : vector<128x1xf32>
    %163 = arith.divf %160, %162 : vector<128x1xf32>
    %164 = vector.extract_strided_slice %38 {offsets = [0, 31], sizes = [128, 1], strides = [1, 1]} : vector<128x32xf32> to vector<128x1xf32>
    %165 = arith.subf %163, %164 : vector<128x1xf32>
    %cst_26 = arith.constant 0.000000e+00 : f32
    %166 = vector.broadcast %cst_26 : f32 to vector<128x1xf32>
    %167 = arith.select %149, %165, %166 : vector<128x1xi1>, vector<128x1xf32>
    %168 = vector.shape_cast %38 : vector<128x32xf32> to vector<8x16x32xf32>
    %cst_27 = arith.constant dense<0.000000e+00> : vector<8x32xf32>
    %169 = vector.multi_reduction <add>, %168, %cst_27 [1] : vector<8x16x32xf32> to vector<8x32xf32>
    %170 = vector.shape_cast %158 : vector<128x1xf32> to vector<8x16x1xf32>
    %cst_28 = arith.constant dense<0.000000e+00> : vector<8x1xf32>
    %171 = vector.multi_reduction <add>, %170, %cst_28 [1] : vector<8x16x1xf32> to vector<8x1xf32>
    %172 = vector.shape_cast %167 : vector<128x1xf32> to vector<8x16x1xf32>
    %cst_29 = arith.constant dense<0.000000e+00> : vector<8x1xf32>
    %173 = vector.multi_reduction <add>, %172, %cst_29 [1] : vector<8x16x1xf32> to vector<8x1xf32>
    %174 = tpu.iota {dimensions = array<i32: 0>} : vector<8x1xi32>
    %c0_i32_30 = arith.constant 0 : i32
    %175 = vector.broadcast %c0_i32_30 : i32 to vector<8x1xi32>
    %176 = arith.cmpi eq, %174, %175 : vector<8x1xi32>
    %cst_31 = arith.constant 0.000000e+00 : f32
    %177 = vector.shape_cast %176 : vector<8x1xi1> to vector<8x1xi1>
    %178 = vector.broadcast %177 : vector<8x1xi1> to vector<8x32xi1>
    %179 = vector.shape_cast %113 : vector<1x32xf32> to vector<1x32xf32>
    %180 = vector.broadcast %179 : vector<1x32xf32> to vector<8x32xf32>
    %181 = vector.broadcast %cst_31 : f32 to vector<8x32xf32>
    %182 = arith.select %178, %180, %181 : vector<8x32xi1>, vector<8x32xf32>
    %183 = arith.addf %169, %182 : vector<8x32xf32>
    %c7_i32 = arith.constant 7 : i32
    %184 = vector.broadcast %c7_i32 : i32 to vector<8x1xi32>
    %185 = arith.cmpi eq, %174, %184 : vector<8x1xi32>
    %cst_32 = arith.constant 0.000000e+00 : f32
    %186 = vector.shape_cast %185 : vector<8x1xi1> to vector<8x1xi1>
    %187 = vector.broadcast %186 : vector<8x1xi1> to vector<8x32xi1>
    %188 = vector.shape_cast %144 : vector<1x32xf32> to vector<1x32xf32>
    %189 = vector.broadcast %188 : vector<1x32xf32> to vector<8x32xf32>
    %190 = vector.broadcast %cst_32 : f32 to vector<8x32xf32>
    %191 = arith.select %187, %189, %190 : vector<8x32xi1>, vector<8x32xf32>
    %192 = arith.addf %183, %191 : vector<8x32xf32>
    %cst_33 = arith.constant 0.000000e+00 : f32
    %193 = vector.shape_cast %80 : vector<1x32xi1> to vector<1x32xi1>
    %194 = vector.broadcast %193 : vector<1x32xi1> to vector<8x32xi1>
    %195 = vector.shape_cast %171 : vector<8x1xf32> to vector<8x1xf32>
    %196 = vector.broadcast %195 : vector<8x1xf32> to vector<8x32xf32>
    %197 = vector.broadcast %cst_33 : f32 to vector<8x32xf32>
    %198 = arith.select %194, %196, %197 : vector<8x32xi1>, vector<8x32xf32>
    %199 = arith.addf %192, %198 : vector<8x32xf32>
    %cst_34 = arith.constant 0.000000e+00 : f32
    %200 = vector.shape_cast %82 : vector<1x32xi1> to vector<1x32xi1>
    %201 = vector.broadcast %200 : vector<1x32xi1> to vector<8x32xi1>
    %202 = vector.shape_cast %173 : vector<8x1xf32> to vector<8x1xf32>
    %203 = vector.broadcast %202 : vector<8x1xf32> to vector<8x32xf32>
    %204 = vector.broadcast %cst_34 : f32 to vector<8x32xf32>
    %205 = arith.select %201, %203, %204 : vector<8x32xi1>, vector<8x32xf32>
    %206 = arith.addf %199, %205 : vector<8x32xf32>
    %207 = arith.truncf %206 : vector<8x32xf32> to vector<8x32xbf16>
    %c0_35 = arith.constant 0 : index
    %c0_36 = arith.constant 0 : index
    %208 = vector.load %arg4[%c0_35, %c0_36] : memref<32x2xbf16, #tpu.memory_space<vmem>>, vector<32x2xbf16>
    %cst_37 = arith.constant dense<0.000000e+00> : vector<8x2xf32>
    %209 = tpu.matmul %207, %208, %cst_37 {dimension_numbers = #tpu.dot_dimension_numbers<[1], [0], [0], [1], [0, 0, 1, 1], [], []>} : vector<8x32xbf16>, vector<32x2xbf16>, vector<8x2xf32> -> vector<8x2xf32>
    %c0_38 = arith.constant 0 : index
    %c0_39 = arith.constant 0 : index
    %c0_40 = arith.constant 0 : index
    %210 = vector.load %arg5[%c0_38, %c0_39, %c0_40] : memref<1x8x2xf32, #tpu.memory_space<vmem>>, vector<1x8x2xf32>
    %211 = vector.shape_cast %210 : vector<1x8x2xf32> to vector<8x2xf32>
    %212 = vector.shape_cast %209 : vector<8x2xf32> to vector<1x8x2xf32>
    tpu.vector_store %arg5[%c0_38, %c0_39, %c0_40], %212 {strides = array<i32>} : memref<1x8x2xf32, #tpu.memory_space<vmem>>, vector<1x8x2xf32>,
    return
  }
  func.func @transform_0(%arg0: i32, %arg1: i32) -> (i32, i32, i32) {
    %c0_i32 = arith.constant 0 : i32
    %c0_i32_0 = arith.constant 0 : i32
    return %arg0, %arg1, %c0_i32 : i32, i32, i32
  }
  func.func @transform_1(%arg0: i32, %arg1: i32) -> (i32, i32, i32, i32) {
    %c0_i32 = arith.constant 0 : i32
    %c0_i32_0 = arith.constant 0 : i32
    %c0_i32_1 = arith.constant 0 : i32
    return %arg0, %arg1, %c0_i32, %c0_i32_0 : i32, i32, i32, i32
  }
  func.func @transform_2(%arg0: i32, %arg1: i32) -> (i32, i32) {
    %c0_i32 = arith.constant 0 : i32
    %c0_i32_0 = arith.constant 0 : i32
    %c0_i32_1 = arith.constant 0 : i32
    return %c0_i32, %c0_i32_0 : i32, i32
  }
  func.func @transform_3(%arg0: i32, %arg1: i32) -> (i32, i32, i32) {
    %c0_i32 = arith.constant 0 : i32
    %c0_i32_0 = arith.constant 0 : i32
    return %arg0, %arg1, %c0_i32 : i32, i32, i32
  }
}

</mosaic_0001>

<llo_original>
// kernel: tpu_custom_call.1
$region0: #{tpu_custom_call.1}
  #allocation0 [shape = 'u32[]', space=smem, size = 0x4, offset = 0x4, fixed_abs, tag = 'smem constant byte address 0x4 - core index']
  #allocation1 [shape = 'u32[144,128]{1,0:T(1,128)}', space=vmem, size = 0x12000, scoped, tag = 'internal scratch']
  %s0 = inlined_call_operand.vmem [shape: f32[2,128,32], index: 0, kind: input, shape index: {}]
  %s1 = inlined_call_operand.vmem [shape: f32[2,1,2,32], index: 1, kind: input, shape index: {}]
  %s2 = inlined_call_operand.vmem [shape: bf16[32,2], index: 2, kind: input, shape index: {}]
  %s3 = inlined_call_operand.vmem [shape: f32[2,8,2], index: 3, kind: output, shape index: {}]
  %s4 = sld [smem:[#allocation0]]
  $region45: #{tpu_custom_call.1} parent=0
    _
  %s6 = ssub.s32 1, %s4
  %s7 = scalar_select 0, %s6, %s4
  loop: start=0, step=1, limit=4
  $region2: #{tpu_custom_call.1} parent=0 // loop_pre_header
    _
  $region3: #{tpu_custom_call.1} parent=0 // loop_header
    %s9 = sphi 0, %s13
    %p10 = scmp.ge.s32.totalorder %s9, 4
    %s16 = sphi 0, %s28
    %s17 = sphi 0, %s24
    %s18 = sphi 0, %s16
    %s19 = sphi 0, %s17
    %s20 = sphi 0, %s18
    %s21 = sphi 0, %s19
    %s33 = sphi 0, %s35
    %s36 = sphi 0, %s33
    %s37 = sphi 0, %s36
    %s53 = sphi 0, %s37
    %s61 = sphi 0, %s63
    %s64 = sphi 0, %s61
    %s65 = sphi 0, %s64
    %s81 = sphi 0, %s65
    %s85 = sphi 0, %s85
    %s87 = sphi 0, %s85
    %s88 = sphi 0, %s87
    %s102 = sphi 0, %s88
    %s110 = sphi 0, %s112
    %s113 = sphi 0, %s110
    %s114 = sphi 0, %s113
    %s130 = sphi 0, %s114
  $region4: #{tpu_custom_call.1} parent=0 // loop_header_branch
    %12 = sbr.rel (%p10) target = $region8
  $region5: #{tpu_custom_call.1} parent=0 // loop_body
    %s14 = ssub.s32 %s9, 1
    %s15 = ssub.s32 %s9, 2
    %s22 = sadd.s32 1, %s17
    %p23 = scmp.ge.s32.totalorder %s22, 1
    %s24 = scalar_select %p23, 0, %s22
    %s25 = sadd.s32 1, %s16
    %s26 = scalar_select %p23, %s25, %s16
    %p27 = scmp.ge.s32.totalorder %s26, 2
    %s28 = scalar_select %p27, 0, %s26
    %s29 = ssub.s32 %s16, %s28
    %s30 = ssub.s32 %s17, %s24
    %s31 = sor.u32 %s29, %s30
    %p32 = scmp.eq.s32.totalorder %s31, 0
    %s34 = sadd.s32 %s33, 1
    %s35 = scalar_select %p32, %s33, %s34
    %p38 = pneg %p32
    %p39 = scmp.eq.s32.totalorder %s9, 1
    %p40 = por %p38, %p39
    %p41 = scmp.ne.s32.totalorder %s33, %s36
    %p42 = scmp.eq.s32.totalorder %s9, 0
    %p43 = por %p41, %p42
    %p44 = scmp.ne.s32.totalorder %s33, %s36
    %p45 = scmp.eq.s32.totalorder %s14, 1
    %p46 = por %p44, %p45
    %p47 = scmp.ne.s32.totalorder %s36, %s37
    %p48 = scmp.eq.s32.totalorder %s14, 0
    %p49 = por %p47, %p48
    %p50 = scmp.ne.s32.totalorder %s36, %s37
    %p51 = scmp.eq.s32.totalorder %s15, 1
    %p52 = por %p50, %p51
    %p54 = scmp.ne.s32.totalorder %s37, %s53
    %p55 = scmp.eq.s32.totalorder %s15, 0
    %p56 = por %p54, %p55
    %s57 = ssub.s32 %s16, %s28
    %s58 = ssub.s32 %s17, %s24
    %s59 = sor.u32 %s57, %s58
    %p60 = scmp.eq.s32.totalorder %s59, 0
    %s62 = sadd.s32 %s61, 1
    %s63 = scalar_select %p60, %s61, %s62
    %p66 = pneg %p60
    %p67 = scmp.eq.s32.totalorder %s9, 1
    %p68 = por %p66, %p67
    %p69 = scmp.ne.s32.totalorder %s61, %s64
    %p70 = scmp.eq.s32.totalorder %s9, 0
    %p71 = por %p69, %p70
    %p72 = scmp.ne.s32.totalorder %s61, %s64
    %p73 = scmp.eq.s32.totalorder %s14, 1
    %p74 = por %p72, %p73
    %p75 = scmp.ne.s32.totalorder %s64, %s65
    %p76 = scmp.eq.s32.totalorder %s14, 0
    %p77 = por %p75, %p76
    %p78 = scmp.ne.s32.totalorder %s64, %s65
    %p79 = scmp.eq.s32.totalorder %s15, 1
    %p80 = por %p78, %p79
    %p82 = scmp.ne.s32.totalorder %s65, %s81
    %p83 = scmp.eq.s32.totalorder %s15, 0
    %p84 = por %p82, %p83
    %s86 = sadd.s32 %s85, 1
    %p89 = scmp.eq.s32.totalorder %s9, 1
    %p90 = scmp.ne.s32.totalorder %s85, %s87
    %p91 = scmp.eq.s32.totalorder %s9, 0
    %p92 = por %p90, %p91
    %p93 = scmp.ne.s32.totalorder %s85, %s87
    %p94 = scmp.eq.s32.totalorder %s14, 1
    %p95 = por %p93, %p94
    %p96 = scmp.ne.s32.totalorder %s87, %s88
    %p97 = scmp.eq.s32.totalorder %s14, 0
    %p98 = por %p96, %p97
    %p99 = scmp.ne.s32.totalorder %s87, %s88
    %p100 = scmp.eq.s32.totalorder %s15, 1
    %p101 = por %p99, %p100
    %p103 = scmp.ne.s32.totalorder %s88, %s102
    %p104 = scmp.eq.s32.totalorder %s15, 0
    %p105 = por %p103, %p104
    %s106 = ssub.s32 %s16, %s28
    %s107 = ssub.s32 %s17, %s24
    %s108 = sor.u32 %s106, %s107
    %p109 = scmp.eq.s32.totalorder %s108, 0
    %s111 = sadd.s32 %s110, 1
    %s112 = scalar_select %p109, %s110, %s111
    %p115 = pneg %p109
    %p116 = scmp.eq.s32.totalorder %s9, 1
    %p117 = por %p115, %p116
    %p118 = scmp.ne.s32.totalorder %s110, %s113
    %p119 = scmp.eq.s32.totalorder %s9, 0
    %p120 = por %p118, %p119
    %p121 = scmp.ne.s32.totalorder %s110, %s113
    %p122 = scmp.eq.s32.totalorder %s14, 1
    %p123 = por %p121, %p122
    %p124 = scmp.ne.s32.totalorder %s113, %s114
    %p125 = scmp.eq.s32.totalorder %s14, 0
    %p126 = por %p124, %p125
    %p127 = scmp.ne.s32.totalorder %s113, %s114
    %p128 = scmp.eq.s32.totalorder %s15, 1
    %p129 = por %p127, %p128
    %p131 = scmp.ne.s32.totalorder %s114, %s130
    %p132 = scmp.eq.s32.totalorder %s15, 0
    %p133 = por %p131, %p132
    %p134 = scmp.le.s32.totalorder 1, %s9
    %p135 = scmp.lt.s32.totalorder %s9, 3
    %p136 = pnand %p134, %p135
    %p137 = pneg %p136
    // Predicated region
    $region9: #{tpu_custom_call.1} parent=5 // pred_check
      _
    $region10: #{tpu_custom_call.1} parent=5 // pred_check_branch
      %139 = sbr.rel (%p136) target = $region12
    $region11: #{tpu_custom_call.1} parent=5 // pred_region
      %s140 = ssub.s32 %s9, 1
      // Predicated region
      $region13: #{tpu_custom_call.1} parent=11 // pred_check
        %p141 = pneg %p98
      $region14: #{tpu_custom_call.1} parent=11 // pred_check_branch
        %143 = sbr.rel (%p141) target = $region16
      $region15: #{tpu_custom_call.1} parent=11 // pred_region
        _
      $region16: #{tpu_custom_call.1} parent=11 // pred_fallthru
        _
    $region12: #{tpu_custom_call.1} parent=5 // pred_fallthru
      _
    %p144 = scmp.lt.s32.totalorder %s9, 2
    // Predicated region
    $region17: #{tpu_custom_call.1} parent=5 // pred_check
      %p145 = pneg %p144
    $region18: #{tpu_custom_call.1} parent=5 // pred_check_branch
      %147 = sbr.rel (%p145) target = $region20
    $region19: #{tpu_custom_call.1} parent=5 // pred_region
      // Predicated region
      $region21: #{tpu_custom_call.1} parent=19 // pred_check
        %p148 = pneg %p43
      $region22: #{tpu_custom_call.1} parent=19 // pred_check_branch
        %150 = sbr.rel (%p148) target = $region24
      $region23: #{tpu_custom_call.1} parent=19 // pred_region
        %s151 = smul.u32 16, %s17
        %p152 = scmp.lt.s32.totalorder %s16, 1
        %s153 = scalar_select %p152, %s16, 1
        %p154 = scmp.lt.s32.totalorder %s151, 15
        %s155 = scalar_select %p154, %s151, 15
        %s156 = smul.addr %s153, 16
        %s157 = sadd.s32 %s155, %s156
        %s158 = smul.addr %s157, 8
        %s159 = scalar_lea.vmem %s0, %s158
        %s160 = smul.u32 16, %s17
      $region24: #{tpu_custom_call.1} parent=19 // pred_fallthru
        _
      // Predicated region
      $region25: #{tpu_custom_call.1} parent=19 // pred_check
        %p161 = pneg %p71
      $region26: #{tpu_custom_call.1} parent=19 // pred_check_branch
        %163 = sbr.rel (%p161) target = $region28
      $region27: #{tpu_custom_call.1} parent=19 // pred_region
        %p164 = scmp.lt.s32.totalorder %s16, 1
        %s165 = scalar_select %p164, %s16, 1
        %p166 = scmp.lt.s32.totalorder %s17, 0
        %s167 = scalar_select %p166, %s17, 0
        %s168 = sadd.s32 %s167, %s165
        %s169 = smul.addr %s168, 2
        %s170 = scalar_lea.vmem %s1, %s169
      $region28: #{tpu_custom_call.1} parent=19 // pred_fallthru
        _
    $region20: #{tpu_custom_call.1} parent=5 // pred_fallthru
      _
    %p171 = scmp.le.s32.totalorder 1, %s9
    %p172 = scmp.lt.s32.totalorder %s9, 3
    %p173 = pnand %p171, %p172
    %p174 = pneg %p173
    // Predicated region
    $region29: #{tpu_custom_call.1} parent=5 // pred_check
      _
    $region30: #{tpu_custom_call.1} parent=5 // pred_check_branch
      %176 = sbr.rel (%p173) target = $region32
    $region31: #{tpu_custom_call.1} parent=5 // pred_region
      %s177 = ssub.s32 %s9, 1
      %s178 = smul.u32 16, %s19
      %p179 = scmp.lt.s32.totalorder %s18, 1
      %s180 = scalar_select %p179, %s18, 1
      %p181 = scmp.lt.s32.totalorder %s178, 15
      %s182 = scalar_select %p181, %s178, 15
      %s183 = smul.addr %s180, 16
      %s184 = sadd.s32 %s182, %s183
      %s185 = smul.addr %s184, 8
      %s186 = scalar_lea.vmem %s0, %s185
      %p187 = pneg %p49
      %p188 = pneg %p46
      %p189 = scmp.lt.s32.totalorder %s18, 1
      %s190 = scalar_select %p189, %s18, 1
      %p191 = scmp.lt.s32.totalorder %s19, 0
      %s192 = scalar_select %p191, %s19, 0
      %s193 = sadd.s32 %s192, %s190
      %s194 = smul.addr %s193, 2
      %s195 = scalar_lea.vmem %s1, %s194
      %p196 = pneg %p77
      %p197 = pneg %p74
      %p198 = pneg %p98
      %p199 = pneg %p95
      %p200 = pneg %p126
      %p201 = pneg %p123
      %p202 = scmp.lt.s32.totalorder %s18, 1
      %s203 = scalar_select %p202, %s18, 1
      %p204 = scmp.lt.s32.totalorder %s19, 0
      %s205 = scalar_select %p204, %s19, 0
      %s206 = sadd.s32 %s205, %s203
      %s207 = smul.addr %s206, 8
      %s208 = scalar_lea.vmem %s3, %s207
      %s209 = smul.u32 16, %s19
      %p210 = scmp.lt.s32.totalorder %s18, 1
      %s211 = scalar_select %p210, %s18, 1
      %p212 = scmp.lt.s32.totalorder %s209, 15
      %s213 = scalar_select %p212, %s209, 15
      %s214 = smul.addr %s211, 16
      %s215 = sadd.s32 %s213, %s214
      %s216 = smul.addr %s215, 8
      %s217 = scalar_lea.vmem %s0, %s216
      %s218 = smul.u32 16, %s19
      %p219 = scmp.lt.s32.totalorder %s18, 1
      %s220 = scalar_select %p219, %s18, 1
      %p221 = scmp.lt.s32.totalorder %s19, 0
      %s222 = scalar_select %p221, %s19, 0
      %s223 = sadd.s32 %s222, %s220
      %s224 = smul.addr %s223, 2
      %s225 = scalar_lea.vmem %s1, %s224
      %p226 = scmp.lt.s32.totalorder %s18, 1
      %s227 = scalar_select %p226, %s18, 1
      %p228 = scmp.lt.s32.totalorder %s19, 0
      %s229 = scalar_select %p228, %s19, 0
      %s230 = sadd.s32 %s229, %s227
      %s231 = smul.addr %s230, 8
      %s232 = scalar_lea.vmem %s3, %s231
      %v234 = vld [vmem:[%s217] sm:$0xff]
      %v235 = vld [vmem:[%s217 + $0x8] sm:$0xff]
      %v236 = vld [vmem:[%s217 + $0x10] sm:$0xff]
      %v237 = vld [vmem:[%s217 + $0x18] sm:$0xff]
      %v238 = vld [vmem:[%s217 + $0x20] sm:$0xff]
      %v239 = vld [vmem:[%s217 + $0x28] sm:$0xff]
      %v240 = vld [vmem:[%s217 + $0x30] sm:$0xff]
      %v241 = vld [vmem:[%s217 + $0x38] sm:$0xff]
      %v242 = vld [vmem:[%s217 + $0x40] sm:$0xff]
      %v243 = vld [vmem:[%s217 + $0x48] sm:$0xff]
      %v244 = vld [vmem:[%s217 + $0x50] sm:$0xff]
      %v245 = vld [vmem:[%s217 + $0x58] sm:$0xff]
      %v246 = vld [vmem:[%s217 + $0x60] sm:$0xff]
      %v247 = vld [vmem:[%s217 + $0x68] sm:$0xff]
      %v248 = vld [vmem:[%s217 + $0x70] sm:$0xff]
      %v249 = vld [vmem:[%s217 + $0x78] sm:$0xff]
      %v250 = vld [vmem:[%s225] sm:$0x3]
      %v251 = vmul.f32 %v234, 1.0002
      %v252 = vmul.f32 %v235, 1.0002
      %v253 = vmul.f32 %v236, 1.0002
      %v254 = vmul.f32 %v237, 1.0002
      %v255 = vmul.f32 %v238, 1.0002
      %v256 = vmul.f32 %v239, 1.0002
      %v257 = vmul.f32 %v240, 1.0002
      %v258 = vmul.f32 %v241, 1.0002
      %v259 = vmul.f32 %v242, 1.0002
      %v260 = vmul.f32 %v243, 1.0002
      %v261 = vmul.f32 %v244, 1.0002
      %v262 = vmul.f32 %v245, 1.0002
      %v263 = vmul.f32 %v246, 1.0002
      %v264 = vmul.f32 %v247, 1.0002
      %v265 = vmul.f32 %v248, 1.0002
      %v266 = vmul.f32 %v249, 1.0002
      %v267 = vrot.slane %v234, 7
      %v268 = vrot.slane %v235, 7
      %v269 = vrot.slane %v236, 7
      %v270 = vrot.slane %v237, 7
      %v271 = vrot.slane %v238, 7
      %v272 = vrot.slane %v239, 7
      %v273 = vrot.slane %v240, 7
      %v274 = vrot.slane %v241, 7
      %v275 = vrot.slane %v242, 7
      %v276 = vrot.slane %v243, 7
      %v277 = vrot.slane %v244, 7
      %v278 = vrot.slane %v245, 7
      %v279 = vrot.slane %v246, 7
      %v280 = vrot.slane %v247, 7
      %v281 = vrot.slane %v248, 7
      %v282 = vrot.slane %v249, 7
      %v283 = vlaneseq
      %v284 = vshrl.u32 %v283, 7
      %vm285 = vcmp.lt.s32.totalorder %v284, 1
      %v286 = vsel %vm285, %v281, %v282
      %v287 = vsel %vm285, %v280, %v281
      %v288 = vsel %vm285, %v279, %v280
      %v289 = vsel %vm285, %v278, %v279
      %v290 = vsel %vm285, %v277, %v278
      %v291 = vsel %vm285, %v276, %v277
      %v292 = vsel %vm285, %v275, %v276
      %v293 = vsel %vm285, %v274, %v275
      %v294 = vsel %vm285, %v273, %v274
      %v295 = vsel %vm285, %v272, %v273
      %v296 = vsel %vm285, %v271, %v272
      %v297 = vsel %vm285, %v270, %v271
      %v298 = vsel %vm285, %v269, %v270
      %v299 = vsel %vm285, %v268, %v269
      %v300 = vsel %vm285, %v267, %v268
      %v301 = vsel %vm285, %v282, %v267
      %v302 = vsub.f32 %v234, %v301
      %v303 = vsub.f32 %v235, %v300
      %v304 = vsub.f32 %v236, %v299
      %v305 = vsub.f32 %v237, %v298
      %v306 = vsub.f32 %v238, %v297
      %v307 = vsub.f32 %v239, %v296
      %v308 = vsub.f32 %v240, %v295
      %v309 = vsub.f32 %v241, %v294
      %v310 = vsub.f32 %v242, %v293
      %v311 = vsub.f32 %v243, %v292
      %v312 = vsub.f32 %v244, %v291
      %v313 = vsub.f32 %v245, %v290
      %v314 = vsub.f32 %v246, %v289
      %v315 = vsub.f32 %v247, %v288
      %v316 = vsub.f32 %v248, %v287
      %v317 = vsub.f32 %v249, %v286
      %v318 = vmul.f32 %v302, %v302
      %v319 = vmul.f32 %v303, %v303
      %v320 = vmul.f32 %v304, %v304
      %v321 = vmul.f32 %v305, %v305
      %v322 = vmul.f32 %v306, %v306
      %v323 = vmul.f32 %v307, %v307
      %v324 = vmul.f32 %v308, %v308
      %v325 = vmul.f32 %v309, %v309
      %v326 = vmul.f32 %v310, %v310
      %v327 = vmul.f32 %v311, %v311
      %v328 = vmul.f32 %v312, %v312
      %v329 = vmul.f32 %v313, %v313
      %v330 = vmul.f32 %v314, %v314
      %v331 = vmul.f32 %v315, %v315
      %v332 = vmul.f32 %v316, %v316
      %v333 = vmul.f32 %v317, %v317
      %v334 = vmul.f32 %v318, -0.125
      %v335 = vmul.f32 %v319, -0.125
      %v336 = vmul.f32 %v320, -0.125
      %v337 = vmul.f32 %v321, -0.125
      %v338 = vmul.f32 %v322, -0.125
      %v339 = vmul.f32 %v323, -0.125
      %v340 = vmul.f32 %v324, -0.125
      %v341 = vmul.f32 %v325, -0.125
      %v342 = vmul.f32 %v326, -0.125
      %v343 = vmul.f32 %v327, -0.125
      %v344 = vmul.f32 %v328, -0.125
      %v345 = vmul.f32 %v329, -0.125
      %v346 = vmul.f32 %v330, -0.125
      %v347 = vmul.f32 %v331, -0.125
      %v348 = vmul.f32 %v332, -0.125
      %v349 = vmul.f32 %v333, -0.125
      %v350 = vmul.f32 %v334, 1.442695
      %v351 = vpow.pop %v350
      %v352 = vmul.f32 %v335, 1.442695
      %v353 = vpow.pop %v352
      %v354 = vmul.f32 %v336, 1.442695
      %v355 = vpow.pop %v354
      %v356 = vmul.f32 %v337, 1.442695
      %v357 = vpow.pop %v356
      %v358 = vmul.f32 %v338, 1.442695
      %v359 = vpow.pop %v358
      %v360 = vmul.f32 %v339, 1.442695
      %v361 = vpow.pop %v360
      %v362 = vmul.f32 %v340, 1.442695
      %v363 = vpow.pop %v362
      %v364 = vmul.f32 %v341, 1.442695
      %v365 = vpow.pop %v364
      %v366 = vmul.f32 %v342, 1.442695
      %v367 = vpow.pop %v366
      %v368 = vmul.f32 %v343, 1.442695
      %v369 = vpow.pop %v368
      %v370 = vmul.f32 %v344, 1.442695
      %v371 = vpow.pop %v370
      %v372 = vmul.f32 %v345, 1.442695
      %v373 = vpow.pop %v372
      %v374 = vmul.f32 %v346, 1.442695
      %v375 = vpow.pop %v374
      %v376 = vmul.f32 %v347, 1.442695
      %v377 = vpow.pop %v376
      %v378 = vmul.f32 %v348, 1.442695
      %v379 = vpow.pop %v378
      %v380 = vmul.f32 %v349, 1.442695
      %v381 = vpow.pop %v380
      %v382 = vmul.f32 %v351, %v301
      %v383 = vmul.f32 %v353, %v300
      %v384 = vmul.f32 %v355, %v299
      %v385 = vmul.f32 %v357, %v298
      %v386 = vmul.f32 %v359, %v297
      %v387 = vmul.f32 %v361, %v296
      %v388 = vmul.f32 %v363, %v295
      %v389 = vmul.f32 %v365, %v294
      %v390 = vmul.f32 %v367, %v293
      %v391 = vmul.f32 %v369, %v292
      %v392 = vmul.f32 %v371, %v291
      %v393 = vmul.f32 %v373, %v290
      %v394 = vmul.f32 %v375, %v289
      %v395 = vmul.f32 %v377, %v288
      %v396 = vmul.f32 %v379, %v287
      %v397 = vmul.f32 %v381, %v286
      %v398 = vadd.f32 %v251, %v382
      %v399 = vadd.f32 %v252, %v383
      %v400 = vadd.f32 %v253, %v384
      %v401 = vadd.f32 %v254, %v385
      %v402 = vadd.f32 %v255, %v386
      %v403 = vadd.f32 %v256, %v387
      %v404 = vadd.f32 %v257, %v388
      %v405 = vadd.f32 %v258, %v389
      %v406 = vadd.f32 %v259, %v390
      %v407 = vadd.f32 %v260, %v391
      %v408 = vadd.f32 %v261, %v392
      %v409 = vadd.f32 %v262, %v393
      %v410 = vadd.f32 %v263, %v394
      %v411 = vadd.f32 %v264, %v395
      %v412 = vadd.f32 %v265, %v396
      %v413 = vadd.f32 %v266, %v397
      %v414 = vadd.f32 %v351, 1.0002
      %v415 = vadd.f32 %v353, 1.0002
      %v416 = vadd.f32 %v355, 1.0002
      %v417 = vadd.f32 %v357, 1.0002
      %v418 = vadd.f32 %v359, 1.0002
      %v419 = vadd.f32 %v361, 1.0002
      %v420 = vadd.f32 %v363, 1.0002
      %v421 = vadd.f32 %v365, 1.0002
      %v422 = vadd.f32 %v367, 1.0002
      %v423 = vadd.f32 %v369, 1.0002
      %v424 = vadd.f32 %v371, 1.0002
      %v425 = vadd.f32 %v373, 1.0002
      %v426 = vadd.f32 %v375, 1.0002
      %v427 = vadd.f32 %v377, 1.0002
      %v428 = vadd.f32 %v379, 1.0002
      %v429 = vadd.f32 %v381, 1.0002
      %v430 = vrot.slane %v234, 1
      %v431 = vrot.slane %v235, 1
      %v432 = vrot.slane %v236, 1
      %v433 = vrot.slane %v237, 1
      %v434 = vrot.slane %v238, 1
      %v435 = vrot.slane %v239, 1
      %v436 = vrot.slane %v240, 1
      %v437 = vrot.slane %v241, 1
      %v438 = vrot.slane %v242, 1
      %v439 = vrot.slane %v243, 1
      %v440 = vrot.slane %v244, 1
      %v441 = vrot.slane %v245, 1
      %v442 = vrot.slane %v246, 1
      %v443 = vrot.slane %v247, 1
      %v444 = vrot.slane %v248, 1
      %v445 = vrot.slane %v249, 1
      %vm446 = vcmp.lt.s32.totalorder %v284, 7
      %v447 = vsel %vm446, %v444, %v445
      %v448 = vsel %vm446, %v443, %v444
      %v449 = vsel %vm446, %v442, %v443
      %v450 = vsel %vm446, %v441, %v442
      %v451 = vsel %vm446, %v440, %v441
      %v452 = vsel %vm446, %v439, %v440
      %v453 = vsel %vm446, %v438, %v439
      %v454 = vsel %vm446, %v437, %v438
      %v455 = vsel %vm446, %v436, %v437
      %v456 = vsel %vm446, %v435, %v436
      %v457 = vsel %vm446, %v434, %v435
      %v458 = vsel %vm446, %v433, %v434
      %v459 = vsel %vm446, %v432, %v433
      %v460 = vsel %vm446, %v431, %v432
      %v461 = vsel %vm446, %v430, %v431
      %v462 = vsel %vm446, %v445, %v430
      %v463 = vrot.slane %v351, 1
      %v464 = vrot.slane %v353, 1
      %v465 = vrot.slane %v355, 1
      %v466 = vrot.slane %v357, 1
      %v467 = vrot.slane %v359, 1
      %v468 = vrot.slane %v361, 1
      %v469 = vrot.slane %v363, 1
      %v470 = vrot.slane %v365, 1
      %v471 = vrot.slane %v367, 1
      %v472 = vrot.slane %v369, 1
      %v473 = vrot.slane %v371, 1
      %v474 = vrot.slane %v373, 1
      %v475 = vrot.slane %v375, 1
      %v476 = vrot.slane %v377, 1
      %v477 = vrot.slane %v379, 1
      %v478 = vrot.slane %v381, 1
      %v479 = vsel %vm446, %v477, %v478
      %v480 = vsel %vm446, %v476, %v477
      %v481 = vsel %vm446, %v475, %v476
      %v482 = vsel %vm446, %v474, %v475
      %v483 = vsel %vm446, %v473, %v474
      %v484 = vsel %vm446, %v472, %v473
      %v485 = vsel %vm446, %v471, %v472
      %v486 = vsel %vm446, %v470, %v471
      %v487 = vsel %vm446, %v469, %v470
      %v488 = vsel %vm446, %v468, %v469
      %v489 = vsel %vm446, %v467, %v468
      %v490 = vsel %vm446, %v466, %v467
      %v491 = vsel %vm446, %v465, %v466
      %v492 = vsel %vm446, %v464, %v465
      %v493 = vsel %vm446, %v463, %v464
      %v494 = vsel %vm446, %v478, %v463
      %v495 = vmul.f32 %v493, %v461
      %v496 = vmul.f32 %v492, %v460
      %v497 = vmul.f32 %v491, %v459
      %v498 = vmul.f32 %v490, %v458
      %v499 = vmul.f32 %v489, %v457
      %v500 = vmul.f32 %v488, %v456
      %v501 = vmul.f32 %v487, %v455
      %v502 = vmul.f32 %v486, %v454
      %v503 = vmul.f32 %v485, %v453
      %v504 = vmul.f32 %v484, %v452
      %v505 = vmul.f32 %v483, %v451
      %v506 = vmul.f32 %v482, %v450
      %v507 = vmul.f32 %v481, %v449
      %v508 = vmul.f32 %v480, %v448
      %v509 = vmul.f32 %v479, %v447
      %v510 = vmul.f32 %v494, %v462
      %v511 = vadd.f32 %v398, %v495
      %v512 = vadd.f32 %v399, %v496
      %v513 = vadd.f32 %v400, %v497
      %v514 = vadd.f32 %v401, %v498
      %v515 = vadd.f32 %v402, %v499
      %v516 = vadd.f32 %v403, %v500
      %v517 = vadd.f32 %v404, %v501
      %v518 = vadd.f32 %v405, %v502
      %v519 = vadd.f32 %v406, %v503
      %v520 = vadd.f32 %v407, %v504
      %v521 = vadd.f32 %v408, %v505
      %v522 = vadd.f32 %v409, %v506
      %v523 = vadd.f32 %v410, %v507
      %v524 = vadd.f32 %v411, %v508
      %v525 = vadd.f32 %v412, %v509
      %v526 = vadd.f32 %v413, %v510
      %v527 = vadd.f32 %v414, %v493
      %v528 = vadd.f32 %v415, %v492
      %v529 = vadd.f32 %v416, %v491
      %v530 = vadd.f32 %v417, %v490
      %v531 = vadd.f32 %v418, %v489
      %v532 = vadd.f32 %v419, %v488
      %v533 = vadd.f32 %v420, %v487
      %v534 = vadd.f32 %v421, %v486
      %v535 = vadd.f32 %v422, %v485
      %v536 = vadd.f32 %v423, %v484
      %v537 = vadd.f32 %v424, %v483
      %v538 = vadd.f32 %v425, %v482
      %v539 = vadd.f32 %v426, %v481
      %v540 = vadd.f32 %v427, %v480
      %v541 = vadd.f32 %v428, %v479
      %v542 = vadd.f32 %v429, %v494
      %vm543 = vcmask 1047808
      %544 = vrot.lane.b32.xlu0 %v234, 32
      %v545 = vpop.permute.xlu0 %544
      %v546 = vsel %vm543, %v545, %v234
      %547 = vrot.lane.b32.xlu0 %v235, 32
      %v548 = vpop.permute.xlu0 %547
      %v549 = vsel %vm543, %v548, %v235
      %550 = vrot.lane.b32.xlu0 %v236, 32
      %v551 = vpop.permute.xlu0 %550
      %v552 = vsel %vm543, %v551, %v236
      %553 = vrot.lane.b32.xlu0 %v237, 32
      %v554 = vpop.permute.xlu0 %553
      %v555 = vsel %vm543, %v554, %v237
      %556 = vrot.lane.b32.xlu0 %v238, 32
      %v557 = vpop.permute.xlu0 %556
      %v558 = vsel %vm543, %v557, %v238
      %559 = vrot.lane.b32.xlu0 %v239, 32
      %v560 = vpop.permute.xlu0 %559
      %v561 = vsel %vm543, %v560, %v239
      %562 = vrot.lane.b32.xlu0 %v240, 32
      %v563 = vpop.permute.xlu0 %562
      %v564 = vsel %vm543, %v563, %v240
      %565 = vrot.lane.b32.xlu0 %v241, 32
      %v566 = vpop.permute.xlu0 %565
      %v567 = vsel %vm543, %v566, %v241
      %568 = vrot.lane.b32.xlu0 %v242, 32
      %v569 = vpop.permute.xlu0 %568
      %v570 = vsel %vm543, %v569, %v242
      %571 = vrot.lane.b32.xlu0 %v243, 32
      %v572 = vpop.permute.xlu0 %571
      %v573 = vsel %vm543, %v572, %v243
      %574 = vrot.lane.b32.xlu0 %v244, 32
      %v575 = vpop.permute.xlu0 %574
      %v576 = vsel %vm543, %v575, %v244
      %577 = vrot.lane.b32.xlu0 %v245, 32
      %v578 = vpop.permute.xlu0 %577
      %v579 = vsel %vm543, %v578, %v245
      %580 = vrot.lane.b32.xlu0 %v246, 32
      %v581 = vpop.permute.xlu0 %580
      %v582 = vsel %vm543, %v581, %v246
      %583 = vrot.lane.b32.xlu0 %v247, 32
      %v584 = vpop.permute.xlu0 %583
      %v585 = vsel %vm543, %v584, %v247
      %586 = vrot.lane.b32.xlu0 %v248, 32
      %v587 = vpop.permute.xlu0 %586
      %v588 = vsel %vm543, %v587, %v248
      %589 = vrot.lane.b32.xlu0 %v249, 32
      %v590 = vpop.permute.xlu0 %589
      %v591 = vsel %vm543, %v590, %v249
      %592 = vrot.lane.b32.xlu0 %v546, 32
      %v593 = vpop.permute.xlu0 %592
      %594 = vrot.lane.b32.xlu0 %v549, 32
      %v595 = vpop.permute.xlu0 %594
      %596 = vrot.lane.b32.xlu0 %v552, 32
      %v597 = vpop.permute.xlu0 %596
      %598 = vrot.lane.b32.xlu0 %v555, 32
      %v599 = vpop.permute.xlu0 %598
      %600 = vrot.lane.b32.xlu0 %v558, 32
      %v601 = vpop.permute.xlu0 %600
      %602 = vrot.lane.b32.xlu0 %v561, 32
      %v603 = vpop.permute.xlu0 %602
      %604 = vrot.lane.b32.xlu0 %v564, 32
      %v605 = vpop.permute.xlu0 %604
      %606 = vrot.lane.b32.xlu0 %v567, 32
      %v607 = vpop.permute.xlu0 %606
      %608 = vrot.lane.b32.xlu0 %v570, 32
      %v609 = vpop.permute.xlu0 %608
      %610 = vrot.lane.b32.xlu0 %v573, 32
      %v611 = vpop.permute.xlu0 %610
      %612 = vrot.lane.b32.xlu0 %v576, 32
      %v613 = vpop.permute.xlu0 %612
      %614 = vrot.lane.b32.xlu0 %v579, 32
      %v615 = vpop.permute.xlu0 %614
      %616 = vrot.lane.b32.xlu0 %v582, 32
      %v617 = vpop.permute.xlu0 %616
      %618 = vrot.lane.b32.xlu0 %v585, 32
      %v619 = vpop.permute.xlu0 %618
      %620 = vrot.lane.b32.xlu0 %v588, 32
      %v621 = vpop.permute.xlu0 %620
      %622 = vrot.lane.b32.xlu0 %v591, 32
      %v623 = vpop.permute.xlu0 %622
      %v624 = vsel %vm543, %v593, %v234
      %v625 = vsel %vm543, %v595, %v235
      %v626 = vsel %vm543, %v597, %v236
      %v627 = vsel %vm543, %v599, %v237
      %v628 = vsel %vm543, %v601, %v238
      %v629 = vsel %vm543, %v603, %v239
      %v630 = vsel %vm543, %v605, %v240
      %v631 = vsel %vm543, %v607, %v241
      %v632 = vsel %vm543, %v609, %v242
      %v633 = vsel %vm543, %v611, %v243
      %v634 = vsel %vm543, %v613, %v244
      %v635 = vsel %vm543, %v615, %v245
      %v636 = vsel %vm543, %v617, %v246
      %v637 = vsel %vm543, %v619, %v247
      %v638 = vsel %vm543, %v621, %v248
      %v639 = vsel %vm543, %v623, %v249
      %656 = vrot.lane.b32.xlu0 %v624, 97
      %v657 = vpop.permute.xlu0 %656
      %658 = vrot.lane.b32.xlu0 %v625, 97
      %v659 = vpop.permute.xlu0 %658
      %660 = vrot.lane.b32.xlu0 %v626, 97
      %v661 = vpop.permute.xlu0 %660
      %662 = vrot.lane.b32.xlu0 %v627, 97
      %v663 = vpop.permute.xlu0 %662
      %664 = vrot.lane.b32.xlu0 %v628, 97
      %v665 = vpop.permute.xlu0 %664
      %666 = vrot.lane.b32.xlu0 %v629, 97
      %v667 = vpop.permute.xlu0 %666
      %668 = vrot.lane.b32.xlu0 %v630, 97
      %v669 = vpop.permute.xlu0 %668
      %670 = vrot.lane.b32.xlu0 %v631, 97
      %v671 = vpop.permute.xlu0 %670
      %672 = vrot.lane.b32.xlu0 %v632, 97
      %v673 = vpop.permute.xlu0 %672
      %674 = vrot.lane.b32.xlu0 %v633, 97
      %v675 = vpop.permute.xlu0 %674
      %676 = vrot.lane.b32.xlu0 %v634, 97
      %v677 = vpop.permute.xlu0 %676
      %678 = vrot.lane.b32.xlu0 %v635, 97
      %v679 = vpop.permute.xlu0 %678
      %680 = vrot.lane.b32.xlu0 %v636, 97
      %v681 = vpop.permute.xlu0 %680
      %682 = vrot.lane.b32.xlu0 %v637, 97
      %v683 = vpop.permute.xlu0 %682
      %684 = vrot.lane.b32.xlu0 %v638, 97
      %v685 = vpop.permute.xlu0 %684
      %686 = vrot.lane.b32.xlu0 %v639, 97
      %v687 = vpop.permute.xlu0 %686
      %v704 = vsub.f32 %v234, %v657
      %v705 = vsub.f32 %v235, %v659
      %v706 = vsub.f32 %v236, %v661
      %v707 = vsub.f32 %v237, %v663
      %v708 = vsub.f32 %v238, %v665
      %v709 = vsub.f32 %v239, %v667
      %v710 = vsub.f32 %v240, %v669
      %v711 = vsub.f32 %v241, %v671
      %v712 = vsub.f32 %v242, %v673
      %v713 = vsub.f32 %v243, %v675
      %v714 = vsub.f32 %v244, %v677
      %v715 = vsub.f32 %v245, %v679
      %v716 = vsub.f32 %v246, %v681
      %v717 = vsub.f32 %v247, %v683
      %v718 = vsub.f32 %v248, %v685
      %v719 = vsub.f32 %v249, %v687
      %v720 = vmul.f32 %v704, %v704
      %v721 = vmul.f32 %v705, %v705
      %v722 = vmul.f32 %v706, %v706
      %v723 = vmul.f32 %v707, %v707
      %v724 = vmul.f32 %v708, %v708
      %v725 = vmul.f32 %v709, %v709
      %v726 = vmul.f32 %v710, %v710
      %v727 = vmul.f32 %v711, %v711
      %v728 = vmul.f32 %v712, %v712
      %v729 = vmul.f32 %v713, %v713
      %v730 = vmul.f32 %v714, %v714
      %v731 = vmul.f32 %v715, %v715
      %v732 = vmul.f32 %v716, %v716
      %v733 = vmul.f32 %v717, %v717
      %v734 = vmul.f32 %v718, %v718
      %v735 = vmul.f32 %v719, %v719
      %v736 = vmul.f32 %v720, -0.125
      %v737 = vmul.f32 %v721, -0.125
      %v738 = vmul.f32 %v722, -0.125
      %v739 = vmul.f32 %v723, -0.125
      %v740 = vmul.f32 %v724, -0.125
      %v741 = vmul.f32 %v725, -0.125
      %v742 = vmul.f32 %v726, -0.125
      %v743 = vmul.f32 %v727, -0.125
      %v744 = vmul.f32 %v728, -0.125
      %v745 = vmul.f32 %v729, -0.125
      %v746 = vmul.f32 %v730, -0.125
      %v747 = vmul.f32 %v731, -0.125
      %v748 = vmul.f32 %v732, -0.125
      %v749 = vmul.f32 %v733, -0.125
      %v750 = vmul.f32 %v734, -0.125
      %v751 = vmul.f32 %v735, -0.125
      %v752 = vmul.f32 %v736, 1.442695
      %v753 = vpow.pop %v752
      %v754 = vmul.f32 %v737, 1.442695
      %v755 = vpow.pop %v754
      %v756 = vmul.f32 %v738, 1.442695
      %v757 = vpow.pop %v756
      %v758 = vmul.f32 %v739, 1.442695
      %v759 = vpow.pop %v758
      %v760 = vmul.f32 %v740, 1.442695
      %v761 = vpow.pop %v760
      %v762 = vmul.f32 %v741, 1.442695
      %v763 = vpow.pop %v762
      %v764 = vmul.f32 %v742, 1.442695
      %v765 = vpow.pop %v764
      %v766 = vmul.f32 %v743, 1.442695
      %v767 = vpow.pop %v766
      %v768 = vmul.f32 %v744, 1.442695
      %v769 = vpow.pop %v768
      %v770 = vmul.f32 %v745, 1.442695
      %v771 = vpow.pop %v770
      %v772 = vmul.f32 %v746, 1.442695
      %v773 = vpow.pop %v772
      %v774 = vmul.f32 %v747, 1.442695
      %v775 = vpow.pop %v774
      %v776 = vmul.f32 %v748, 1.442695
      %v777 = vpow.pop %v776
      %v778 = vmul.f32 %v749, 1.442695
      %v779 = vpow.pop %v778
      %v780 = vmul.f32 %v750, 1.442695
      %v781 = vpow.pop %v780
      %v782 = vmul.f32 %v751, 1.442695
      %v783 = vpow.pop %v782
      %v784 = vmul.f32 %v753, %v657
      %v785 = vmul.f32 %v755, %v659
      %v786 = vmul.f32 %v757, %v661
      %v787 = vmul.f32 %v759, %v663
      %v788 = vmul.f32 %v761, %v665
      %v789 = vmul.f32 %v763, %v667
      %v790 = vmul.f32 %v765, %v669
      %v791 = vmul.f32 %v767, %v671
      %v792 = vmul.f32 %v769, %v673
      %v793 = vmul.f32 %v771, %v675
      %v794 = vmul.f32 %v773, %v677
      %v795 = vmul.f32 %v775, %v679
      %v796 = vmul.f32 %v777, %v681
      %v797 = vmul.f32 %v779, %v683
      %v798 = vmul.f32 %v781, %v685
      %v799 = vmul.f32 %v783, %v687
      %v800 = vadd.f32 %v511, %v784
      %v801 = vadd.f32 %v512, %v785
      %v802 = vadd.f32 %v513, %v786
      %v803 = vadd.f32 %v514, %v787
      %v804 = vadd.f32 %v515, %v788
      %v805 = vadd.f32 %v516, %v789
      %v806 = vadd.f32 %v517, %v790
      %v807 = vadd.f32 %v518, %v791
      %v808 = vadd.f32 %v519, %v792
      %v809 = vadd.f32 %v520, %v793
      %v810 = vadd.f32 %v521, %v794
      %v811 = vadd.f32 %v522, %v795
      %v812 = vadd.f32 %v523, %v796
      %v813 = vadd.f32 %v524, %v797
      %v814 = vadd.f32 %v525, %v798
      %v815 = vadd.f32 %v526, %v799
      %v816 = vadd.f32 %v527, %v753
      %v817 = vadd.f32 %v528, %v755
      %v818 = vadd.f32 %v529, %v757
      %v819 = vadd.f32 %v530, %v759
      %v820 = vadd.f32 %v531, %v761
      %v821 = vadd.f32 %v532, %v763
      %v822 = vadd.f32 %v533, %v765
      %v823 = vadd.f32 %v534, %v767
      %v824 = vadd.f32 %v535, %v769
      %v825 = vadd.f32 %v536, %v771
      %v826 = vadd.f32 %v537, %v773
      %v827 = vadd.f32 %v538, %v775
      %v828 = vadd.f32 %v539, %v777
      %v829 = vadd.f32 %v540, %v779
      %v830 = vadd.f32 %v541, %v781
      %v831 = vadd.f32 %v542, %v783
      %832 = vrot.lane.b32.xlu0 %v753, 32
      %v833 = vpop.permute.xlu0 %832
      %v834 = vsel %vm543, %v833, %v753
      %835 = vrot.lane.b32.xlu0 %v755, 32
      %v836 = vpop.permute.xlu0 %835
      %v837 = vsel %vm543, %v836, %v755
      %838 = vrot.lane.b32.xlu0 %v757, 32
      %v839 = vpop.permute.xlu0 %838
      %v840 = vsel %vm543, %v839, %v757
      %841 = vrot.lane.b32.xlu0 %v759, 32
      %v842 = vpop.permute.xlu0 %841
      %v843 = vsel %vm543, %v842, %v759
      %844 = vrot.lane.b32.xlu0 %v761, 32
      %v845 = vpop.permute.xlu0 %844
      %v846 = vsel %vm543, %v845, %v761
      %847 = vrot.lane.b32.xlu0 %v763, 32
      %v848 = vpop.permute.xlu0 %847
      %v849 = vsel %vm543, %v848, %v763
      %850 = vrot.lane.b32.xlu0 %v765, 32
      %v851 = vpop.permute.xlu0 %850
      %v852 = vsel %vm543, %v851, %v765
      %853 = vrot.lane.b32.xlu0 %v767, 32
      %v854 = vpop.permute.xlu0 %853
      %v855 = vsel %vm543, %v854, %v767
      %856 = vrot.lane.b32.xlu0 %v769, 32
      %v857 = vpop.permute.xlu0 %856
      %v858 = vsel %vm543, %v857, %v769
      %859 = vrot.lane.b32.xlu0 %v771, 32
      %v860 = vpop.permute.xlu0 %859
      %v861 = vsel %vm543, %v860, %v771
      %862 = vrot.lane.b32.xlu0 %v773, 32
      %v863 = vpop.permute.xlu0 %862
      %v864 = vsel %vm543, %v863, %v773
      %865 = vrot.lane.b32.xlu0 %v775, 32
      %v866 = vpop.permute.xlu0 %865
      %v867 = vsel %vm543, %v866, %v775
      %868 = vrot.lane.b32.xlu0 %v777, 32
      %v869 = vpop.permute.xlu0 %868
      %v870 = vsel %vm543, %v869, %v777
      %871 = vrot.lane.b32.xlu0 %v779, 32
      %v872 = vpop.permute.xlu0 %871
      %v873 = vsel %vm543, %v872, %v779
      %874 = vrot.lane.b32.xlu0 %v781, 32
      %v875 = vpop.permute.xlu0 %874
      %v876 = vsel %vm543, %v875, %v781
      %877 = vrot.lane.b32.xlu0 %v783, 32
      %v878 = vpop.permute.xlu0 %877
      %v879 = vsel %vm543, %v878, %v783
      %880 = vrot.lane.b32.xlu0 %v834, 32
      %v881 = vpop.permute.xlu0 %880
      %882 = vrot.lane.b32.xlu0 %v837, 32
      %v883 = vpop.permute.xlu0 %882
      %884 = vrot.lane.b32.xlu0 %v840, 32
      %v885 = vpop.permute.xlu0 %884
      %886 = vrot.lane.b32.xlu0 %v843, 32
      %v887 = vpop.permute.xlu0 %886
      %888 = vrot.lane.b32.xlu0 %v846, 32
      %v889 = vpop.permute.xlu0 %888
      %890 = vrot.lane.b32.xlu0 %v849, 32
      %v891 = vpop.permute.xlu0 %890
      %892 = vrot.lane.b32.xlu0 %v852, 32
      %v893 = vpop.permute.xlu0 %892
      %894 = vrot.lane.b32.xlu0 %v855, 32
      %v895 = vpop.permute.xlu0 %894
      %896 = vrot.lane.b32.xlu0 %v858, 32
      %v897 = vpop.permute.xlu0 %896
      %898 = vrot.lane.b32.xlu0 %v861, 32
      %v899 = vpop.permute.xlu0 %898
      %900 = vrot.lane.b32.xlu0 %v864, 32
      %v901 = vpop.permute.xlu0 %900
      %902 = vrot.lane.b32.xlu0 %v867, 32
      %v903 = vpop.permute.xlu0 %902
      %904 = vrot.lane.b32.xlu0 %v870, 32
      %v905 = vpop.permute.xlu0 %904
      %906 = vrot.lane.b32.xlu0 %v873, 32
      %v907 = vpop.permute.xlu0 %906
      %908 = vrot.lane.b32.xlu0 %v876, 32
      %v909 = vpop.permute.xlu0 %908
      %910 = vrot.lane.b32.xlu0 %v879, 32
      %v911 = vpop.permute.xlu0 %910
      %v912 = vsel %vm543, %v881, %v753
      %v913 = vsel %vm543, %v883, %v755
      %v914 = vsel %vm543, %v885, %v757
      %v915 = vsel %vm543, %v887, %v759
      %v916 = vsel %vm543, %v889, %v761
      %v917 = vsel %vm543, %v891, %v763
      %v918 = vsel %vm543, %v893, %v765
      %v919 = vsel %vm543, %v895, %v767
      %v920 = vsel %vm543, %v897, %v769
      %v921 = vsel %vm543, %v899, %v771
      %v922 = vsel %vm543, %v901, %v773
      %v923 = vsel %vm543, %v903, %v775
      %v924 = vsel %vm543, %v905, %v777
      %v925 = vsel %vm543, %v907, %v779
      %v926 = vsel %vm543, %v909, %v781
      %v927 = vsel %vm543, %v911, %v783
      %v928 = vmul.f32 %v912, %v624
      %v929 = vmul.f32 %v913, %v625
      %v930 = vmul.f32 %v914, %v626
      %v931 = vmul.f32 %v915, %v627
      %v932 = vmul.f32 %v916, %v628
      %v933 = vmul.f32 %v917, %v629
      %v934 = vmul.f32 %v918, %v630
      %v935 = vmul.f32 %v919, %v631
      %v936 = vmul.f32 %v920, %v632
      %v937 = vmul.f32 %v921, %v633
      %v938 = vmul.f32 %v922, %v634
      %v939 = vmul.f32 %v923, %v635
      %v940 = vmul.f32 %v924, %v636
      %v941 = vmul.f32 %v925, %v637
      %v942 = vmul.f32 %v926, %v638
      %v943 = vmul.f32 %v927, %v639
      %960 = vrot.lane.b32.xlu0 %v928, 127
      %v961 = vpop.permute.xlu0 %960
      %962 = vrot.lane.b32.xlu0 %v929, 127
      %v963 = vpop.permute.xlu0 %962
      %964 = vrot.lane.b32.xlu0 %v930, 127
      %v965 = vpop.permute.xlu0 %964
      %966 = vrot.lane.b32.xlu0 %v931, 127
      %v967 = vpop.permute.xlu0 %966
      %968 = vrot.lane.b32.xlu0 %v932, 127
      %v969 = vpop.permute.xlu0 %968
      %970 = vrot.lane.b32.xlu0 %v933, 127
      %v971 = vpop.permute.xlu0 %970
      %972 = vrot.lane.b32.xlu0 %v934, 127
      %v973 = vpop.permute.xlu0 %972
      %974 = vrot.lane.b32.xlu0 %v935, 127
      %v975 = vpop.permute.xlu0 %974
      %976 = vrot.lane.b32.xlu0 %v936, 127
      %v977 = vpop.permute.xlu0 %976
      %978 = vrot.lane.b32.xlu0 %v937, 127
      %v979 = vpop.permute.xlu0 %978
      %980 = vrot.lane.b32.xlu0 %v938, 127
      %v981 = vpop.permute.xlu0 %980
      %982 = vrot.lane.b32.xlu0 %v939, 127
      %v983 = vpop.permute.xlu0 %982
      %984 = vrot.lane.b32.xlu0 %v940, 127
      %v985 = vpop.permute.xlu0 %984
      %986 = vrot.lane.b32.xlu0 %v941, 127
      %v987 = vpop.permute.xlu0 %986
      %988 = vrot.lane.b32.xlu0 %v942, 127
      %v989 = vpop.permute.xlu0 %988
      %990 = vrot.lane.b32.xlu0 %v943, 127
      %v991 = vpop.permute.xlu0 %990
      %v1008 = vadd.f32 %v800, %v961
      %v1009 = vadd.f32 %v801, %v963
      %v1010 = vadd.f32 %v802, %v965
      %v1011 = vadd.f32 %v803, %v967
      %v1012 = vadd.f32 %v804, %v969
      %v1013 = vadd.f32 %v805, %v971
      %v1014 = vadd.f32 %v806, %v973
      %v1015 = vadd.f32 %v807, %v975
      %v1016 = vadd.f32 %v808, %v977
      %v1017 = vadd.f32 %v809, %v979
      %v1018 = vadd.f32 %v810, %v981
      %v1019 = vadd.f32 %v811, %v983
      %v1020 = vadd.f32 %v812, %v985
      %v1021 = vadd.f32 %v813, %v987
      %v1022 = vadd.f32 %v814, %v989
      %v1023 = vadd.f32 %v815, %v991
      %1040 = vrot.lane.b32.xlu0 %v912, 127
      %v1041 = vpop.permute.xlu0 %1040
      %1042 = vrot.lane.b32.xlu0 %v913, 127
      %v1043 = vpop.permute.xlu0 %1042
      %1044 = vrot.lane.b32.xlu0 %v914, 127
      %v1045 = vpop.permute.xlu0 %1044
      %1046 = vrot.lane.b32.xlu0 %v915, 127
      %v1047 = vpop.permute.xlu0 %1046
      %1048 = vrot.lane.b32.xlu0 %v916, 127
      %v1049 = vpop.permute.xlu0 %1048
      %1050 = vrot.lane.b32.xlu0 %v917, 127
      %v1051 = vpop.permute.xlu0 %1050
      %1052 = vrot.lane.b32.xlu0 %v918, 127
      %v1053 = vpop.permute.xlu0 %1052
      %1054 = vrot.lane.b32.xlu0 %v919, 127
      %v1055 = vpop.permute.xlu0 %1054
      %1056 = vrot.lane.b32.xlu0 %v920, 127
      %v1057 = vpop.permute.xlu0 %1056
      %1058 = vrot.lane.b32.xlu0 %v921, 127
      %v1059 = vpop.permute.xlu0 %1058
      %1060 = vrot.lane.b32.xlu0 %v922, 127
      %v1061 = vpop.permute.xlu0 %1060
      %1062 = vrot.lane.b32.xlu0 %v923, 127
      %v1063 = vpop.permute.xlu0 %1062
      %1064 = vrot.lane.b32.xlu0 %v924, 127
      %v1065 = vpop.permute.xlu0 %1064
      %1066 = vrot.lane.b32.xlu0 %v925, 127
      %v1067 = vpop.permute.xlu0 %1066
      %1068 = vrot.lane.b32.xlu0 %v926, 127
      %v1069 = vpop.permute.xlu0 %1068
      %1070 = vrot.lane.b32.xlu0 %v927, 127
      %v1071 = vpop.permute.xlu0 %1070
      %v1088 = vadd.f32 %v816, %v1041
      %v1089 = vadd.f32 %v817, %v1043
      %v1090 = vadd.f32 %v818, %v1045
      %v1091 = vadd.f32 %v819, %v1047
      %v1092 = vadd.f32 %v820, %v1049
      %v1093 = vadd.f32 %v821, %v1051
      %v1094 = vadd.f32 %v822, %v1053
      %v1095 = vadd.f32 %v823, %v1055
      %v1096 = vadd.f32 %v824, %v1057
      %v1097 = vadd.f32 %v825, %v1059
      %v1098 = vadd.f32 %v826, %v1061
      %v1099 = vadd.f32 %v827, %v1063
      %v1100 = vadd.f32 %v828, %v1065
      %v1101 = vadd.f32 %v829, %v1067
      %v1102 = vadd.f32 %v830, %v1069
      %v1103 = vadd.f32 %v831, %v1071
      %v1104 = vrcp.pop %v1088
      %v1105 = vrcp.pop %v1089
      %v1106 = vrcp.pop %v1090
      %v1107 = vrcp.pop %v1091
      %v1108 = vrcp.pop %v1092
      %v1109 = vrcp.pop %v1093
      %v1110 = vrcp.pop %v1094
      %v1111 = vrcp.pop %v1095
      %v1112 = vrcp.pop %v1096
      %v1113 = vrcp.pop %v1097
      %v1114 = vrcp.pop %v1098
      %v1115 = vrcp.pop %v1099
      %v1116 = vrcp.pop %v1100
      %v1117 = vrcp.pop %v1101
      %v1118 = vrcp.pop %v1102
      %v1119 = vrcp.pop %v1103
      %v1120 = vmul.f32 %v1008, %v1104
      %v1121 = vmul.f32 %v1009, %v1105
      %v1122 = vmul.f32 %v1010, %v1106
      %v1123 = vmul.f32 %v1011, %v1107
      %v1124 = vmul.f32 %v1012, %v1108
      %v1125 = vmul.f32 %v1013, %v1109
      %v1126 = vmul.f32 %v1014, %v1110
      %v1127 = vmul.f32 %v1015, %v1111
      %v1128 = vmul.f32 %v1016, %v1112
      %v1129 = vmul.f32 %v1017, %v1113
      %v1130 = vmul.f32 %v1018, %v1114
      %v1131 = vmul.f32 %v1019, %v1115
      %v1132 = vmul.f32 %v1020, %v1116
      %v1133 = vmul.f32 %v1021, %v1117
      %v1134 = vmul.f32 %v1022, %v1118
      %v1135 = vmul.f32 %v1023, %v1119
      %v1136 = vsub.f32 %v234, %v250
      %v1137 = vmul.f32 %v1136, %v1136
      %v1138 = vmul.f32 %v1137, -0.125
      %v1139 = vmul.f32 %v1138, 1.442695
      %v1140 = vpow.pop %v1139
      %v1142 = vrot.slane %v250, 2
      %v1144 = vsub.f32 %v249, %v1142
      %v1145 = vmul.f32 %v1144, %v1144
      %v1146 = vmul.f32 %v1145, -0.125
      %v1147 = vmul.f32 %v1146, 1.442695
      %v1148 = vpow.pop %v1147
      %v1149 = vmul.f32 %v1140, %v250
      %v1151 = vrot.slane %v249, 7
      %v1153 = vmul.f32 %v351, %v1151
      %v1154 = vsub.f32 %v1149, %v1153
      %v1155 = vsub.f32 %v1140, %v351
      %v1156 = vmul.f32 %v1148, %v1142
      %v1157 = vmul.f32 %v351, %v234
      %v1159 = vrot.slane %v1157, 1
      %v1161 = vsub.f32 %v1156, %v1159
      %v1163 = vrot.slane %v351, 1
      %v1165 = vsub.f32 %v1148, %v1163
      %v1166 = vmul.f32 %v753, %v234
      %v1167 = vmul.f32 %v755, %v235
      %v1168 = vmul.f32 %v757, %v236
      %v1169 = vmul.f32 %v759, %v237
      %v1170 = vmul.f32 %v761, %v238
      %v1171 = vmul.f32 %v763, %v239
      %v1172 = vmul.f32 %v765, %v240
      %v1173 = vmul.f32 %v767, %v241
      %v1174 = vmul.f32 %v769, %v242
      %v1175 = vmul.f32 %v771, %v243
      %v1176 = vmul.f32 %v773, %v244
      %v1177 = vmul.f32 %v775, %v245
      %v1178 = vmul.f32 %v777, %v246
      %v1179 = vmul.f32 %v779, %v247
      %v1180 = vmul.f32 %v781, %v248
      %v1181 = vmul.f32 %v783, %v249
      %1197 = vrot.lane.b32.xlu0 %v234, 97
      %v1198 = vpop.permute.xlu0 %1197
      %1199 = vrot.lane.b32.xlu0 %v235, 97
      %v1200 = vpop.permute.xlu0 %1199
      %1201 = vrot.lane.b32.xlu0 %v236, 97
      %v1202 = vpop.permute.xlu0 %1201
      %1203 = vrot.lane.b32.xlu0 %v237, 97
      %v1204 = vpop.permute.xlu0 %1203
      %1205 = vrot.lane.b32.xlu0 %v238, 97
      %v1206 = vpop.permute.xlu0 %1205
      %1207 = vrot.lane.b32.xlu0 %v239, 97
      %v1208 = vpop.permute.xlu0 %1207
      %1209 = vrot.lane.b32.xlu0 %v240, 97
      %v1210 = vpop.permute.xlu0 %1209
      %1211 = vrot.lane.b32.xlu0 %v241, 97
      %v1212 = vpop.permute.xlu0 %1211
      %1213 = vrot.lane.b32.xlu0 %v242, 97
      %v1214 = vpop.permute.xlu0 %1213
      %1215 = vrot.lane.b32.xlu0 %v243, 97
      %v1216 = vpop.permute.xlu0 %1215
      %1217 = vrot.lane.b32.xlu0 %v244, 97
      %v1218 = vpop.permute.xlu0 %1217
      %1219 = vrot.lane.b32.xlu0 %v245, 97
      %v1220 = vpop.permute.xlu0 %1219
      %1221 = vrot.lane.b32.xlu0 %v246, 97
      %v1222 = vpop.permute.xlu0 %1221
      %1223 = vrot.lane.b32.xlu0 %v247, 97
      %v1224 = vpop.permute.xlu0 %1223
      %1225 = vrot.lane.b32.xlu0 %v248, 97
      %v1226 = vpop.permute.xlu0 %1225
      %1227 = vrot.lane.b32.xlu0 %v249, 97
      %v1228 = vpop.permute.xlu0 %1227
      %v1245 = vmul.f32 %v753, %v1198
      %v1246 = vmul.f32 %v755, %v1200
      %v1247 = vmul.f32 %v757, %v1202
      %v1248 = vmul.f32 %v759, %v1204
      %v1249 = vmul.f32 %v761, %v1206
      %v1250 = vmul.f32 %v763, %v1208
      %v1251 = vmul.f32 %v765, %v1210
      %v1252 = vmul.f32 %v767, %v1212
      %v1253 = vmul.f32 %v769, %v1214
      %v1254 = vmul.f32 %v771, %v1216
      %v1255 = vmul.f32 %v773, %v1218
      %v1256 = vmul.f32 %v775, %v1220
      %v1257 = vmul.f32 %v777, %v1222
      %v1258 = vmul.f32 %v779, %v1224
      %v1259 = vmul.f32 %v781, %v1226
      %v1260 = vmul.f32 %v783, %v1228
      %1277 = vrot.lane.b32.xlu0 %v1245, 1
      %v1278 = vpop.permute.xlu0 %1277
      %1279 = vrot.lane.b32.xlu0 %v1246, 1
      %v1280 = vpop.permute.xlu0 %1279
      %1281 = vrot.lane.b32.xlu0 %v1247, 1
      %v1282 = vpop.permute.xlu0 %1281
      %1283 = vrot.lane.b32.xlu0 %v1248, 1
      %v1284 = vpop.permute.xlu0 %1283
      %1285 = vrot.lane.b32.xlu0 %v1249, 1
      %v1286 = vpop.permute.xlu0 %1285
      %1287 = vrot.lane.b32.xlu0 %v1250, 1
      %v1288 = vpop.permute.xlu0 %1287
      %1289 = vrot.lane.b32.xlu0 %v1251, 1
      %v1290 = vpop.permute.xlu0 %1289
      %1291 = vrot.lane.b32.xlu0 %v1252, 1
      %v1292 = vpop.permute.xlu0 %1291
      %1293 = vrot.lane.b32.xlu0 %v1253, 1
      %v1294 = vpop.permute.xlu0 %1293
      %1295 = vrot.lane.b32.xlu0 %v1254, 1
      %v1296 = vpop.permute.xlu0 %1295
      %1297 = vrot.lane.b32.xlu0 %v1255, 1
      %v1298 = vpop.permute.xlu0 %1297
      %1299 = vrot.lane.b32.xlu0 %v1256, 1
      %v1300 = vpop.permute.xlu0 %1299
      %1301 = vrot.lane.b32.xlu0 %v1257, 1
      %v1302 = vpop.permute.xlu0 %1301
      %1303 = vrot.lane.b32.xlu0 %v1258, 1
      %v1304 = vpop.permute.xlu0 %1303
      %1305 = vrot.lane.b32.xlu0 %v1259, 1
      %v1306 = vpop.permute.xlu0 %1305
      %1307 = vrot.lane.b32.xlu0 %v1260, 1
      %v1308 = vpop.permute.xlu0 %1307
      %v1325 = vsub.f32 %v1166, %v1278
      %v1326 = vsub.f32 %v1167, %v1280
      %v1327 = vsub.f32 %v1168, %v1282
      %v1328 = vsub.f32 %v1169, %v1284
      %v1329 = vsub.f32 %v1170, %v1286
      %v1330 = vsub.f32 %v1171, %v1288
      %v1331 = vsub.f32 %v1172, %v1290
      %v1332 = vsub.f32 %v1173, %v1292
      %v1333 = vsub.f32 %v1174, %v1294
      %v1334 = vsub.f32 %v1175, %v1296
      %v1335 = vsub.f32 %v1176, %v1298
      %v1336 = vsub.f32 %v1177, %v1300
      %v1337 = vsub.f32 %v1178, %v1302
      %v1338 = vsub.f32 %v1179, %v1304
      %v1339 = vsub.f32 %v1180, %v1306
      %v1340 = vsub.f32 %v1181, %v1308
      %1357 = vrot.lane.b32.xlu0 %v753, 1
      %v1358 = vpop.permute.xlu0 %1357
      %1359 = vrot.lane.b32.xlu0 %v755, 1
      %v1360 = vpop.permute.xlu0 %1359
      %1361 = vrot.lane.b32.xlu0 %v757, 1
      %v1362 = vpop.permute.xlu0 %1361
      %1363 = vrot.lane.b32.xlu0 %v759, 1
      %v1364 = vpop.permute.xlu0 %1363
      %1365 = vrot.lane.b32.xlu0 %v761, 1
      %v1366 = vpop.permute.xlu0 %1365
      %1367 = vrot.lane.b32.xlu0 %v763, 1
      %v1368 = vpop.permute.xlu0 %1367
      %1369 = vrot.lane.b32.xlu0 %v765, 1
      %v1370 = vpop.permute.xlu0 %1369
      %1371 = vrot.lane.b32.xlu0 %v767, 1
      %v1372 = vpop.permute.xlu0 %1371
      %1373 = vrot.lane.b32.xlu0 %v769, 1
      %v1374 = vpop.permute.xlu0 %1373
      %1375 = vrot.lane.b32.xlu0 %v771, 1
      %v1376 = vpop.permute.xlu0 %1375
      %1377 = vrot.lane.b32.xlu0 %v773, 1
      %v1378 = vpop.permute.xlu0 %1377
      %1379 = vrot.lane.b32.xlu0 %v775, 1
      %v1380 = vpop.permute.xlu0 %1379
      %1381 = vrot.lane.b32.xlu0 %v777, 1
      %v1382 = vpop.permute.xlu0 %1381
      %1383 = vrot.lane.b32.xlu0 %v779, 1
      %v1384 = vpop.permute.xlu0 %1383
      %1385 = vrot.lane.b32.xlu0 %v781, 1
      %v1386 = vpop.permute.xlu0 %1385
      %1387 = vrot.lane.b32.xlu0 %v783, 1
      %v1388 = vpop.permute.xlu0 %1387
      %v1405 = vsub.f32 %v753, %v1358
      %v1406 = vsub.f32 %v755, %v1360
      %v1407 = vsub.f32 %v757, %v1362
      %v1408 = vsub.f32 %v759, %v1364
      %v1409 = vsub.f32 %v761, %v1366
      %v1410 = vsub.f32 %v763, %v1368
      %v1411 = vsub.f32 %v765, %v1370
      %v1412 = vsub.f32 %v767, %v1372
      %v1413 = vsub.f32 %v769, %v1374
      %v1414 = vsub.f32 %v771, %v1376
      %v1415 = vsub.f32 %v773, %v1378
      %v1416 = vsub.f32 %v775, %v1380
      %v1417 = vsub.f32 %v777, %v1382
      %v1418 = vsub.f32 %v779, %v1384
      %v1419 = vsub.f32 %v781, %v1386
      %v1420 = vsub.f32 %v783, %v1388
      %1421 = vrot.lane.b32.xlu0 %v234, 1
      %v1422 = vpop.permute.xlu0 %1421
      %1423 = vrot.lane.b32.xlu0 %v235, 1
      %v1424 = vpop.permute.xlu0 %1423
      %1425 = vrot.lane.b32.xlu0 %v236, 1
      %v1426 = vpop.permute.xlu0 %1425
      %1427 = vrot.lane.b32.xlu0 %v237, 1
      %v1428 = vpop.permute.xlu0 %1427
      %1429 = vrot.lane.b32.xlu0 %v238, 1
      %v1430 = vpop.permute.xlu0 %1429
      %1431 = vrot.lane.b32.xlu0 %v239, 1
      %v1432 = vpop.permute.xlu0 %1431
      %1433 = vrot.lane.b32.xlu0 %v240, 1
      %v1434 = vpop.permute.xlu0 %1433
      %1435 = vrot.lane.b32.xlu0 %v241, 1
      %v1436 = vpop.permute.xlu0 %1435
      %1437 = vrot.lane.b32.xlu0 %v242, 1
      %v1438 = vpop.permute.xlu0 %1437
      %1439 = vrot.lane.b32.xlu0 %v243, 1
      %v1440 = vpop.permute.xlu0 %1439
      %1441 = vrot.lane.b32.xlu0 %v244, 1
      %v1442 = vpop.permute.xlu0 %1441
      %1443 = vrot.lane.b32.xlu0 %v245, 1
      %v1444 = vpop.permute.xlu0 %1443
      %1445 = vrot.lane.b32.xlu0 %v246, 1
      %v1446 = vpop.permute.xlu0 %1445
      %1447 = vrot.lane.b32.xlu0 %v247, 1
      %v1448 = vpop.permute.xlu0 %1447
      %1449 = vrot.lane.b32.xlu0 %v248, 1
      %v1450 = vpop.permute.xlu0 %1449
      %1451 = vrot.lane.b32.xlu0 %v249, 1
      %v1452 = vpop.permute.xlu0 %1451
      %v1469 = vmul.f32 %v753, %v1422
      %v1470 = vmul.f32 %v755, %v1424
      %v1471 = vmul.f32 %v757, %v1426
      %v1472 = vmul.f32 %v759, %v1428
      %v1473 = vmul.f32 %v761, %v1430
      %v1474 = vmul.f32 %v763, %v1432
      %v1475 = vmul.f32 %v765, %v1434
      %v1476 = vmul.f32 %v767, %v1436
      %v1477 = vmul.f32 %v769, %v1438
      %v1478 = vmul.f32 %v771, %v1440
      %v1479 = vmul.f32 %v773, %v1442
      %v1480 = vmul.f32 %v775, %v1444
      %v1481 = vmul.f32 %v777, %v1446
      %v1482 = vmul.f32 %v779, %v1448
      %v1483 = vmul.f32 %v781, %v1450
      %v1484 = vmul.f32 %v783, %v1452
      %1501 = vrot.lane.b32.xlu0 %v1166, 31
      %v1502 = vpop.permute.xlu0 %1501
      %1503 = vrot.lane.b32.xlu0 %v1167, 31
      %v1504 = vpop.permute.xlu0 %1503
      %1505 = vrot.lane.b32.xlu0 %v1168, 31
      %v1506 = vpop.permute.xlu0 %1505
      %1507 = vrot.lane.b32.xlu0 %v1169, 31
      %v1508 = vpop.permute.xlu0 %1507
      %1509 = vrot.lane.b32.xlu0 %v1170, 31
      %v1510 = vpop.permute.xlu0 %1509
      %1511 = vrot.lane.b32.xlu0 %v1171, 31
      %v1512 = vpop.permute.xlu0 %1511
      %1513 = vrot.lane.b32.xlu0 %v1172, 31
      %v1514 = vpop.permute.xlu0 %1513
      %1515 = vrot.lane.b32.xlu0 %v1173, 31
      %v1516 = vpop.permute.xlu0 %1515
      %1517 = vrot.lane.b32.xlu0 %v1174, 31
      %v1518 = vpop.permute.xlu0 %1517
      %1519 = vrot.lane.b32.xlu0 %v1175, 31
      %v1520 = vpop.permute.xlu0 %1519
      %1521 = vrot.lane.b32.xlu0 %v1176, 31
      %v1522 = vpop.permute.xlu0 %1521
      %1523 = vrot.lane.b32.xlu0 %v1177, 31
      %v1524 = vpop.permute.xlu0 %1523
      %1525 = vrot.lane.b32.xlu0 %v1178, 31
      %v1526 = vpop.permute.xlu0 %1525
      %1527 = vrot.lane.b32.xlu0 %v1179, 31
      %v1528 = vpop.permute.xlu0 %1527
      %1529 = vrot.lane.b32.xlu0 %v1180, 31
      %v1530 = vpop.permute.xlu0 %1529
      %1531 = vrot.lane.b32.xlu0 %v1181, 31
      %v1532 = vpop.permute.xlu0 %1531
      %v1549 = vsub.f32 %v1469, %v1502
      %v1550 = vsub.f32 %v1470, %v1504
      %v1551 = vsub.f32 %v1471, %v1506
      %v1552 = vsub.f32 %v1472, %v1508
      %v1553 = vsub.f32 %v1473, %v1510
      %v1554 = vsub.f32 %v1474, %v1512
      %v1555 = vsub.f32 %v1475, %v1514
      %v1556 = vsub.f32 %v1476, %v1516
      %v1557 = vsub.f32 %v1477, %v1518
      %v1558 = vsub.f32 %v1478, %v1520
      %v1559 = vsub.f32 %v1479, %v1522
      %v1560 = vsub.f32 %v1480, %v1524
      %v1561 = vsub.f32 %v1481, %v1526
      %v1562 = vsub.f32 %v1482, %v1528
      %v1563 = vsub.f32 %v1483, %v1530
      %v1564 = vsub.f32 %v1484, %v1532
      %1565 = vrot.lane.b32.xlu0 %v753, 31
      %v1566 = vpop.permute.xlu0 %1565
      %1567 = vrot.lane.b32.xlu0 %v755, 31
      %v1568 = vpop.permute.xlu0 %1567
      %1569 = vrot.lane.b32.xlu0 %v757, 31
      %v1570 = vpop.permute.xlu0 %1569
      %1571 = vrot.lane.b32.xlu0 %v759, 31
      %v1572 = vpop.permute.xlu0 %1571
      %1573 = vrot.lane.b32.xlu0 %v761, 31
      %v1574 = vpop.permute.xlu0 %1573
      %1575 = vrot.lane.b32.xlu0 %v763, 31
      %v1576 = vpop.permute.xlu0 %1575
      %1577 = vrot.lane.b32.xlu0 %v765, 31
      %v1578 = vpop.permute.xlu0 %1577
      %1579 = vrot.lane.b32.xlu0 %v767, 31
      %v1580 = vpop.permute.xlu0 %1579
      %1581 = vrot.lane.b32.xlu0 %v769, 31
      %v1582 = vpop.permute.xlu0 %1581
      %1583 = vrot.lane.b32.xlu0 %v771, 31
      %v1584 = vpop.permute.xlu0 %1583
      %1585 = vrot.lane.b32.xlu0 %v773, 31
      %v1586 = vpop.permute.xlu0 %1585
      %1587 = vrot.lane.b32.xlu0 %v775, 31
      %v1588 = vpop.permute.xlu0 %1587
      %1589 = vrot.lane.b32.xlu0 %v777, 31
      %v1590 = vpop.permute.xlu0 %1589
      %1591 = vrot.lane.b32.xlu0 %v779, 31
      %v1592 = vpop.permute.xlu0 %1591
      %1593 = vrot.lane.b32.xlu0 %v781, 31
      %v1594 = vpop.permute.xlu0 %1593
      %1595 = vrot.lane.b32.xlu0 %v783, 31
      %v1596 = vpop.permute.xlu0 %1595
      %v1613 = vsub.f32 %v753, %v1566
      %v1614 = vsub.f32 %v755, %v1568
      %v1615 = vsub.f32 %v757, %v1570
      %v1616 = vsub.f32 %v759, %v1572
      %v1617 = vsub.f32 %v761, %v1574
      %v1618 = vsub.f32 %v763, %v1576
      %v1619 = vsub.f32 %v765, %v1578
      %v1620 = vsub.f32 %v767, %v1580
      %v1621 = vsub.f32 %v769, %v1582
      %v1622 = vsub.f32 %v771, %v1584
      %v1623 = vsub.f32 %v773, %v1586
      %v1624 = vsub.f32 %v775, %v1588
      %v1625 = vsub.f32 %v777, %v1590
      %v1626 = vsub.f32 %v779, %v1592
      %v1627 = vsub.f32 %v781, %v1594
      %v1628 = vsub.f32 %v783, %v1596
      %v1629 = vlaneseq
      %v1630 = vand.u32 %v1629, 127
      %v1631 = vadd.s32 %v284, 8
      %v1632 = vadd.s32 %v284, 16
      %v1633 = vadd.s32 %v284, 24
      %v1634 = vadd.s32 %v284, 32
      %v1635 = vadd.s32 %v284, 40
      %v1636 = vadd.s32 %v284, 48
      %v1637 = vadd.s32 %v284, 56
      %v1638 = vadd.s32 %v284, 64
      %v1639 = vadd.s32 %v284, 72
      %v1640 = vadd.s32 %v284, 80
      %v1641 = vadd.s32 %v284, 88
      %v1642 = vadd.s32 %v284, 96
      %v1643 = vadd.s32 %v284, 104
      %v1644 = vadd.s32 %v284, 112
      %v1645 = vadd.s32 %v284, 120
      %vm1646 = vcmp.eq.s32.totalorder %v1630, 0
      %vm1647 = vcmp.eq.s32.totalorder %v1630, 31
      %v1648 = vadd.f32 %v1008, %v1154
      %1650 = vset.pattern.permute.xlu0 1
      %1651 = vperm.xlu0 %1650, %v1325
      %v1652 = vpop.permute.xlu0 %1651
      %v1654 = vsel %vm1646, %v1652, 0.0
      %v1655 = vadd.f32 %v1648, %v1654
      %1657 = vset.pattern.permute.xlu0 31
      %1658 = vperm.xlu0 %1657, %v1549
      %v1659 = vpop.permute.xlu0 %1658
      %v1661 = vsel %vm1647, %v1659, 0.0
      %v1662 = vadd.f32 %v1655, %v1661
      %v1663 = vadd.f32 %v1088, %v1155
      %1665 = vset.pattern.permute.xlu0 1
      %1666 = vperm.xlu0 %1665, %v1405
      %v1667 = vpop.permute.xlu0 %1666
      %v1669 = vsel %vm1646, %v1667, 0.0
      %v1670 = vadd.f32 %v1663, %v1669
      %1672 = vset.pattern.permute.xlu0 31
      %1673 = vperm.xlu0 %1672, %v1613
      %v1674 = vpop.permute.xlu0 %1673
      %v1676 = vsel %vm1647, %v1674, 0.0
      %v1677 = vadd.f32 %v1670, %v1676
      %v1678 = vrcp.pop %v1677
      %v1679 = vmul.f32 %v1662, %v1678
      %v1680 = vsub.f32 %v1679, %v1120
      %v1681 = vadd.f32 %v1023, %v1161
      %1683 = vset.pattern.permute.xlu0 1
      %1684 = vperm.xlu0 %1683, %v1340
      %v1685 = vpop.permute.xlu0 %1684
      %v1687 = vsel %vm1646, %v1685, 0.0
      %v1688 = vadd.f32 %v1681, %v1687
      %1690 = vset.pattern.permute.xlu0 31
      %1691 = vperm.xlu0 %1690, %v1564
      %v1692 = vpop.permute.xlu0 %1691
      %v1694 = vsel %vm1647, %v1692, 0.0
      %v1695 = vadd.f32 %v1688, %v1694
      %v1696 = vadd.f32 %v1103, %v1165
      %1698 = vset.pattern.permute.xlu0 1
      %1699 = vperm.xlu0 %1698, %v1420
      %v1700 = vpop.permute.xlu0 %1699
      %v1702 = vsel %vm1646, %v1700, 0.0
      %v1703 = vadd.f32 %v1696, %v1702
      %1705 = vset.pattern.permute.xlu0 31
      %1706 = vperm.xlu0 %1705, %v1628
      %v1707 = vpop.permute.xlu0 %1706
      %v1709 = vsel %vm1647, %v1707, 0.0
      %v1710 = vadd.f32 %v1703, %v1709
      %v1711 = vrcp.pop %v1710
      %v1712 = vmul.f32 %v1695, %v1711
      %v1713 = vsub.f32 %v1712, %v1135
      %vm1714 = vcmp.gt.s32.totalorder %v284, 0
      %vm1715 = vcmp.gt.s32.totalorder %v1631, 0
      %vm1716 = vcmp.gt.s32.totalorder %v1632, 0
      %vm1717 = vcmp.gt.s32.totalorder %v1633, 0
      %vm1718 = vcmp.gt.s32.totalorder %v1634, 0
      %vm1719 = vcmp.gt.s32.totalorder %v1635, 0
      %vm1720 = vcmp.gt.s32.totalorder %v1636, 0
      %vm1721 = vcmp.gt.s32.totalorder %v1637, 0
      %vm1722 = vcmp.gt.s32.totalorder %v1638, 0
      %vm1723 = vcmp.gt.s32.totalorder %v1639, 0
      %vm1724 = vcmp.gt.s32.totalorder %v1640, 0
      %vm1725 = vcmp.gt.s32.totalorder %v1641, 0
      %vm1726 = vcmp.gt.s32.totalorder %v1642, 0
      %vm1727 = vcmp.gt.s32.totalorder %v1643, 0
      %vm1728 = vcmp.gt.s32.totalorder %v1644, 0
      %vm1729 = vcmp.gt.s32.totalorder %v1645, 0
      %vm1730 = vcmp.lt.s32.totalorder %v284, 127
      %vm1731 = vcmp.lt.s32.totalorder %v1631, 127
      %vm1732 = vcmp.lt.s32.totalorder %v1632, 127
      %vm1733 = vcmp.lt.s32.totalorder %v1633, 127
      %vm1734 = vcmp.lt.s32.totalorder %v1634, 127
      %vm1735 = vcmp.lt.s32.totalorder %v1635, 127
      %vm1736 = vcmp.lt.s32.totalorder %v1636, 127
      %vm1737 = vcmp.lt.s32.totalorder %v1637, 127
      %vm1738 = vcmp.lt.s32.totalorder %v1638, 127
      %vm1739 = vcmp.lt.s32.totalorder %v1639, 127
      %vm1740 = vcmp.lt.s32.totalorder %v1640, 127
      %vm1741 = vcmp.lt.s32.totalorder %v1641, 127
      %vm1742 = vcmp.lt.s32.totalorder %v1642, 127
      %vm1743 = vcmp.lt.s32.totalorder %v1643, 127
      %vm1744 = vcmp.lt.s32.totalorder %v1644, 127
      %vm1745 = vcmp.lt.s32.totalorder %v1645, 127
      %vm1746 = vmand %vm1714, %vm1730
      %vm1747 = vmand %vm1715, %vm1731
      %vm1748 = vmand %vm1716, %vm1732
      %vm1749 = vmand %vm1717, %vm1733
      %vm1750 = vmand %vm1718, %vm1734
      %vm1751 = vmand %vm1719, %vm1735
      %vm1752 = vmand %vm1720, %vm1736
      %vm1753 = vmand %vm1721, %vm1737
      %vm1754 = vmand %vm1722, %vm1738
      %vm1755 = vmand %vm1723, %vm1739
      %vm1756 = vmand %vm1724, %vm1740
      %vm1757 = vmand %vm1725, %vm1741
      %vm1758 = vmand %vm1726, %vm1742
      %vm1759 = vmand %vm1727, %vm1743
      %vm1760 = vmand %vm1728, %vm1744
      %vm1761 = vmand %vm1729, %vm1745
      %1776 = vrot.lane.b32.xlu0 %v1325, 127
      %v1777 = vpop.permute.xlu0 %1776
      %1778 = vrot.lane.b32.xlu0 %v1326, 127
      %v1779 = vpop.permute.xlu0 %1778
      %1780 = vrot.lane.b32.xlu0 %v1327, 127
      %v1781 = vpop.permute.xlu0 %1780
      %1782 = vrot.lane.b32.xlu0 %v1328, 127
      %v1783 = vpop.permute.xlu0 %1782
      %1784 = vrot.lane.b32.xlu0 %v1329, 127
      %v1785 = vpop.permute.xlu0 %1784
      %1786 = vrot.lane.b32.xlu0 %v1330, 127
      %v1787 = vpop.permute.xlu0 %1786
      %1788 = vrot.lane.b32.xlu0 %v1331, 127
      %v1789 = vpop.permute.xlu0 %1788
      %1790 = vrot.lane.b32.xlu0 %v1332, 127
      %v1791 = vpop.permute.xlu0 %1790
      %1792 = vrot.lane.b32.xlu0 %v1333, 127
      %v1793 = vpop.permute.xlu0 %1792
      %1794 = vrot.lane.b32.xlu0 %v1334, 127
      %v1795 = vpop.permute.xlu0 %1794
      %1796 = vrot.lane.b32.xlu0 %v1335, 127
      %v1797 = vpop.permute.xlu0 %1796
      %1798 = vrot.lane.b32.xlu0 %v1336, 127
      %v1799 = vpop.permute.xlu0 %1798
      %1800 = vrot.lane.b32.xlu0 %v1337, 127
      %v1801 = vpop.permute.xlu0 %1800
      %1802 = vrot.lane.b32.xlu0 %v1338, 127
      %v1803 = vpop.permute.xlu0 %1802
      %1804 = vrot.lane.b32.xlu0 %v1339, 127
      %v1805 = vpop.permute.xlu0 %1804
      %1806 = vrot.lane.b32.xlu0 %v1340, 127
      %v1807 = vpop.permute.xlu0 %1806
      %v1824 = vadd.f32 %v1008, %v1777
      %v1825 = vadd.f32 %v1009, %v1779
      %v1826 = vadd.f32 %v1010, %v1781
      %v1827 = vadd.f32 %v1011, %v1783
      %v1828 = vadd.f32 %v1012, %v1785
      %v1829 = vadd.f32 %v1013, %v1787
      %v1830 = vadd.f32 %v1014, %v1789
      %v1831 = vadd.f32 %v1015, %v1791
      %v1832 = vadd.f32 %v1016, %v1793
      %v1833 = vadd.f32 %v1017, %v1795
      %v1834 = vadd.f32 %v1018, %v1797
      %v1835 = vadd.f32 %v1019, %v1799
      %v1836 = vadd.f32 %v1020, %v1801
      %v1837 = vadd.f32 %v1021, %v1803
      %v1838 = vadd.f32 %v1022, %v1805
      %v1839 = vadd.f32 %v1023, %v1807
      %1854 = vrot.lane.b32.xlu0 %v1405, 127
      %v1855 = vpop.permute.xlu0 %1854
      %1856 = vrot.lane.b32.xlu0 %v1406, 127
      %v1857 = vpop.permute.xlu0 %1856
      %1858 = vrot.lane.b32.xlu0 %v1407, 127
      %v1859 = vpop.permute.xlu0 %1858
      %1860 = vrot.lane.b32.xlu0 %v1408, 127
      %v1861 = vpop.permute.xlu0 %1860
      %1862 = vrot.lane.b32.xlu0 %v1409, 127
      %v1863 = vpop.permute.xlu0 %1862
      %1864 = vrot.lane.b32.xlu0 %v1410, 127
      %v1865 = vpop.permute.xlu0 %1864
      %1866 = vrot.lane.b32.xlu0 %v1411, 127
      %v1867 = vpop.permute.xlu0 %1866
      %1868 = vrot.lane.b32.xlu0 %v1412, 127
      %v1869 = vpop.permute.xlu0 %1868
      %1870 = vrot.lane.b32.xlu0 %v1413, 127
      %v1871 = vpop.permute.xlu0 %1870
      %1872 = vrot.lane.b32.xlu0 %v1414, 127
      %v1873 = vpop.permute.xlu0 %1872
      %1874 = vrot.lane.b32.xlu0 %v1415, 127
      %v1875 = vpop.permute.xlu0 %1874
      %1876 = vrot.lane.b32.xlu0 %v1416, 127
      %v1877 = vpop.permute.xlu0 %1876
      %1878 = vrot.lane.b32.xlu0 %v1417, 127
      %v1879 = vpop.permute.xlu0 %1878
      %1880 = vrot.lane.b32.xlu0 %v1418, 127
      %v1881 = vpop.permute.xlu0 %1880
      %1882 = vrot.lane.b32.xlu0 %v1419, 127
      %v1883 = vpop.permute.xlu0 %1882
      %1884 = vrot.lane.b32.xlu0 %v1420, 127
      %v1885 = vpop.permute.xlu0 %1884
      %v1902 = vadd.f32 %v1088, %v1855
      %v1903 = vadd.f32 %v1089, %v1857
      %v1904 = vadd.f32 %v1090, %v1859
      %v1905 = vadd.f32 %v1091, %v1861
      %v1906 = vadd.f32 %v1092, %v1863
      %v1907 = vadd.f32 %v1093, %v1865
      %v1908 = vadd.f32 %v1094, %v1867
      %v1909 = vadd.f32 %v1095, %v1869
      %v1910 = vadd.f32 %v1096, %v1871
      %v1911 = vadd.f32 %v1097, %v1873
      %v1912 = vadd.f32 %v1098, %v1875
      %v1913 = vadd.f32 %v1099, %v1877
      %v1914 = vadd.f32 %v1100, %v1879
      %v1915 = vadd.f32 %v1101, %v1881
      %v1916 = vadd.f32 %v1102, %v1883
      %v1917 = vadd.f32 %v1103, %v1885
      %v1918 = vrcp.pop %v1902
      %v1919 = vmul.f32 %v1824, %v1918
      %v1920 = vrcp.pop %v1903
      %v1921 = vmul.f32 %v1825, %v1920
      %v1922 = vrcp.pop %v1904
      %v1923 = vmul.f32 %v1826, %v1922
      %v1924 = vrcp.pop %v1905
      %v1925 = vmul.f32 %v1827, %v1924
      %v1926 = vrcp.pop %v1906
      %v1927 = vmul.f32 %v1828, %v1926
      %v1928 = vrcp.pop %v1907
      %v1929 = vmul.f32 %v1829, %v1928
      %v1930 = vrcp.pop %v1908
      %v1931 = vmul.f32 %v1830, %v1930
      %v1932 = vrcp.pop %v1909
      %v1933 = vmul.f32 %v1831, %v1932
      %v1934 = vrcp.pop %v1910
      %v1935 = vmul.f32 %v1832, %v1934
      %v1936 = vrcp.pop %v1911
      %v1937 = vmul.f32 %v1833, %v1936
      %v1938 = vrcp.pop %v1912
      %v1939 = vmul.f32 %v1834, %v1938
      %v1940 = vrcp.pop %v1913
      %v1941 = vmul.f32 %v1835, %v1940
      %v1942 = vrcp.pop %v1914
      %v1943 = vmul.f32 %v1836, %v1942
      %v1944 = vrcp.pop %v1915
      %v1945 = vmul.f32 %v1837, %v1944
      %v1946 = vrcp.pop %v1916
      %v1947 = vmul.f32 %v1838, %v1946
      %v1948 = vrcp.pop %v1917
      %v1949 = vmul.f32 %v1839, %v1948
      %v1950 = vsub.f32 %v1919, %v1120
      %v1951 = vsub.f32 %v1921, %v1121
      %v1952 = vsub.f32 %v1923, %v1122
      %v1953 = vsub.f32 %v1925, %v1123
      %v1954 = vsub.f32 %v1927, %v1124
      %v1955 = vsub.f32 %v1929, %v1125
      %v1956 = vsub.f32 %v1931, %v1126
      %v1957 = vsub.f32 %v1933, %v1127
      %v1958 = vsub.f32 %v1935, %v1128
      %v1959 = vsub.f32 %v1937, %v1129
      %v1960 = vsub.f32 %v1939, %v1130
      %v1961 = vsub.f32 %v1941, %v1131
      %v1962 = vsub.f32 %v1943, %v1132
      %v1963 = vsub.f32 %v1945, %v1133
      %v1964 = vsub.f32 %v1947, %v1134
      %v1965 = vsub.f32 %v1949, %v1135
      %v1966 = vsel %vm1746, %v1950, 0.0
      %v1967 = vsel %vm1747, %v1951, 0.0
      %v1968 = vsel %vm1748, %v1952, 0.0
      %v1969 = vsel %vm1749, %v1953, 0.0
      %v1970 = vsel %vm1750, %v1954, 0.0
      %v1971 = vsel %vm1751, %v1955, 0.0
      %v1972 = vsel %vm1752, %v1956, 0.0
      %v1973 = vsel %vm1753, %v1957, 0.0
      %v1974 = vsel %vm1754, %v1958, 0.0
      %v1975 = vsel %vm1755, %v1959, 0.0
      %v1976 = vsel %vm1756, %v1960, 0.0
      %v1977 = vsel %vm1757, %v1961, 0.0
      %v1978 = vsel %vm1758, %v1962, 0.0
      %v1979 = vsel %vm1759, %v1963, 0.0
      %v1980 = vsel %vm1760, %v1964, 0.0
      %v1981 = vsel %vm1761, %v1965, 0.0
      %v1982 = vadd.f32 %v1008, %v1549
      %v1983 = vadd.f32 %v1009, %v1550
      %v1984 = vadd.f32 %v1010, %v1551
      %v1985 = vadd.f32 %v1011, %v1552
      %v1986 = vadd.f32 %v1012, %v1553
      %v1987 = vadd.f32 %v1013, %v1554
      %v1988 = vadd.f32 %v1014, %v1555
      %v1989 = vadd.f32 %v1015, %v1556
      %v1990 = vadd.f32 %v1016, %v1557
      %v1991 = vadd.f32 %v1017, %v1558
      %v1992 = vadd.f32 %v1018, %v1559
      %v1993 = vadd.f32 %v1019, %v1560
      %v1994 = vadd.f32 %v1020, %v1561
      %v1995 = vadd.f32 %v1021, %v1562
      %v1996 = vadd.f32 %v1022, %v1563
      %v1997 = vadd.f32 %v1023, %v1564
      %v1998 = vadd.f32 %v1088, %v1613
      %v1999 = vadd.f32 %v1089, %v1614
      %v2000 = vadd.f32 %v1090, %v1615
      %v2001 = vadd.f32 %v1091, %v1616
      %v2002 = vadd.f32 %v1092, %v1617
      %v2003 = vadd.f32 %v1093, %v1618
      %v2004 = vadd.f32 %v1094, %v1619
      %v2005 = vadd.f32 %v1095, %v1620
      %v2006 = vadd.f32 %v1096, %v1621
      %v2007 = vadd.f32 %v1097, %v1622
      %v2008 = vadd.f32 %v1098, %v1623
      %v2009 = vadd.f32 %v1099, %v1624
      %v2010 = vadd.f32 %v1100, %v1625
      %v2011 = vadd.f32 %v1101, %v1626
      %v2012 = vadd.f32 %v1102, %v1627
      %v2013 = vadd.f32 %v1103, %v1628
      %v2014 = vrcp.pop %v1998
      %v2015 = vmul.f32 %v1982, %v2014
      %v2016 = vrcp.pop %v1999
      %v2017 = vmul.f32 %v1983, %v2016
      %v2018 = vrcp.pop %v2000
      %v2019 = vmul.f32 %v1984, %v2018
      %v2020 = vrcp.pop %v2001
      %v2021 = vmul.f32 %v1985, %v2020
      %v2022 = vrcp.pop %v2002
      %v2023 = vmul.f32 %v1986, %v2022
      %v2024 = vrcp.pop %v2003
      %v2025 = vmul.f32 %v1987, %v2024
      %v2026 = vrcp.pop %v2004
      %v2027 = vmul.f32 %v1988, %v2026
      %v2028 = vrcp.pop %v2005
      %v2029 = vmul.f32 %v1989, %v2028
      %v2030 = vrcp.pop %v2006
      %v2031 = vmul.f32 %v1990, %v2030
      %v2032 = vrcp.pop %v2007
      %v2033 = vmul.f32 %v1991, %v2032
      %v2034 = vrcp.pop %v2008
      %v2035 = vmul.f32 %v1992, %v2034
      %v2036 = vrcp.pop %v2009
      %v2037 = vmul.f32 %v1993, %v2036
      %v2038 = vrcp.pop %v2010
      %v2039 = vmul.f32 %v1994, %v2038
      %v2040 = vrcp.pop %v2011
      %v2041 = vmul.f32 %v1995, %v2040
      %v2042 = vrcp.pop %v2012
      %v2043 = vmul.f32 %v1996, %v2042
      %v2044 = vrcp.pop %v2013
      %v2045 = vmul.f32 %v1997, %v2044
      %v2046 = vsub.f32 %v2015, %v1120
      %v2047 = vsub.f32 %v2017, %v1121
      %v2048 = vsub.f32 %v2019, %v1122
      %v2049 = vsub.f32 %v2021, %v1123
      %v2050 = vsub.f32 %v2023, %v1124
      %v2051 = vsub.f32 %v2025, %v1125
      %v2052 = vsub.f32 %v2027, %v1126
      %v2053 = vsub.f32 %v2029, %v1127
      %v2054 = vsub.f32 %v2031, %v1128
      %v2055 = vsub.f32 %v2033, %v1129
      %v2056 = vsub.f32 %v2035, %v1130
      %v2057 = vsub.f32 %v2037, %v1131
      %v2058 = vsub.f32 %v2039, %v1132
      %v2059 = vsub.f32 %v2041, %v1133
      %v2060 = vsub.f32 %v2043, %v1134
      %v2061 = vsub.f32 %v2045, %v1135
      %v2062 = vsel %vm1746, %v2046, 0.0
      %v2063 = vsel %vm1747, %v2047, 0.0
      %v2064 = vsel %vm1748, %v2048, 0.0
      %v2065 = vsel %vm1749, %v2049, 0.0
      %v2066 = vsel %vm1750, %v2050, 0.0
      %v2067 = vsel %vm1751, %v2051, 0.0
      %v2068 = vsel %vm1752, %v2052, 0.0
      %v2069 = vsel %vm1753, %v2053, 0.0
      %v2070 = vsel %vm1754, %v2054, 0.0
      %v2071 = vsel %vm1755, %v2055, 0.0
      %v2072 = vsel %vm1756, %v2056, 0.0
      %v2073 = vsel %vm1757, %v2057, 0.0
      %v2074 = vsel %vm1758, %v2058, 0.0
      %v2075 = vsel %vm1759, %v2059, 0.0
      %v2076 = vsel %vm1760, %v2060, 0.0
      %v2077 = vsel %vm1761, %v2061, 0.0
      %vm2078 = vcmask 261120
      %v2079 = vsel %vm2078, %v1120, 0.0
      %v2080 = vsel %vm2078, %v1121, 0.0
      %v2081 = vadd.f32 %v2079, %v2080
      %v2082 = vrot.slane %v2081, 4
      %v2083 = vadd.f32 %v2081, %v2082
      %v2084 = vrot.slane %v2083, 2
      %v2085 = vadd.f32 %v2083, %v2084
      %v2086 = vrot.slane %v2085, 1
      %v2087 = vadd.f32 %v2085, %v2086
      %v2088 = vsel %vm2078, %v1122, 0.0
      %v2089 = vsel %vm2078, %v1123, 0.0
      %v2090 = vadd.f32 %v2088, %v2089
      %v2091 = vrot.slane %v2090, 4
      %v2092 = vadd.f32 %v2090, %v2091
      %v2093 = vrot.slane %v2092, 2
      %v2094 = vadd.f32 %v2092, %v2093
      %v2095 = vrot.slane %v2094, 1
      %v2096 = vadd.f32 %v2094, %v2095
      %v2097 = vsel %vm2078, %v1124, 0.0
      %v2098 = vsel %vm2078, %v1125, 0.0
      %v2099 = vadd.f32 %v2097, %v2098
      %v2100 = vrot.slane %v2099, 4
      %v2101 = vadd.f32 %v2099, %v2100
      %v2102 = vrot.slane %v2101, 2
      %v2103 = vadd.f32 %v2101, %v2102
      %v2104 = vrot.slane %v2103, 1
      %v2105 = vadd.f32 %v2103, %v2104
      %v2106 = vsel %vm2078, %v1126, 0.0
      %v2107 = vsel %vm2078, %v1127, 0.0
      %v2108 = vadd.f32 %v2106, %v2107
      %v2109 = vrot.slane %v2108, 4
      %v2110 = vadd.f32 %v2108, %v2109
      %v2111 = vrot.slane %v2110, 2
      %v2112 = vadd.f32 %v2110, %v2111
      %v2113 = vrot.slane %v2112, 1
      %v2114 = vadd.f32 %v2112, %v2113
      %v2115 = vsel %vm2078, %v1128, 0.0
      %v2116 = vsel %vm2078, %v1129, 0.0
      %v2117 = vadd.f32 %v2115, %v2116
      %v2118 = vrot.slane %v2117, 4
      %v2119 = vadd.f32 %v2117, %v2118
      %v2120 = vrot.slane %v2119, 2
      %v2121 = vadd.f32 %v2119, %v2120
      %v2122 = vrot.slane %v2121, 1
      %v2123 = vadd.f32 %v2121, %v2122
      %v2124 = vsel %vm2078, %v1130, 0.0
      %v2125 = vsel %vm2078, %v1131, 0.0
      %v2126 = vadd.f32 %v2124, %v2125
      %v2127 = vrot.slane %v2126, 4
      %v2128 = vadd.f32 %v2126, %v2127
      %v2129 = vrot.slane %v2128, 2
      %v2130 = vadd.f32 %v2128, %v2129
      %v2131 = vrot.slane %v2130, 1
      %v2132 = vadd.f32 %v2130, %v2131
      %v2133 = vsel %vm2078, %v1132, 0.0
      %v2134 = vsel %vm2078, %v1133, 0.0
      %v2135 = vadd.f32 %v2133, %v2134
      %v2136 = vrot.slane %v2135, 4
      %v2137 = vadd.f32 %v2135, %v2136
      %v2138 = vrot.slane %v2137, 2
      %v2139 = vadd.f32 %v2137, %v2138
      %v2140 = vrot.slane %v2139, 1
      %v2141 = vadd.f32 %v2139, %v2140
      %v2142 = vsel %vm2078, %v1134, 0.0
      %v2143 = vsel %vm2078, %v1135, 0.0
      %v2144 = vadd.f32 %v2142, %v2143
      %v2145 = vrot.slane %v2144, 4
      %v2146 = vadd.f32 %v2144, %v2145
      %v2147 = vrot.slane %v2146, 2
      %v2148 = vadd.f32 %v2146, %v2147
      %v2149 = vrot.slane %v2148, 1
      %v2150 = vadd.f32 %v2148, %v2149
      %vm2151 = vcmask 7168
      %v2152 = vsel %vm2151, %v1966, 0.0
      %v2153 = vsel %vm2151, %v1967, 0.0
      %v2154 = vadd.f32 %v2152, %v2153
      %v2155 = vrot.slane %v2154, 4
      %v2156 = vadd.f32 %v2154, %v2155
      %v2157 = vrot.slane %v2156, 2
      %v2158 = vadd.f32 %v2156, %v2157
      %v2159 = vrot.slane %v2158, 1
      %v2160 = vadd.f32 %v2158, %v2159
      %v2161 = vsel %vm2151, %v1968, 0.0
      %v2162 = vsel %vm2151, %v1969, 0.0
      %v2163 = vadd.f32 %v2161, %v2162
      %v2164 = vrot.slane %v2163, 4
      %v2165 = vadd.f32 %v2163, %v2164
      %v2166 = vrot.slane %v2165, 2
      %v2167 = vadd.f32 %v2165, %v2166
      %v2168 = vrot.slane %v2167, 1
      %v2169 = vadd.f32 %v2167, %v2168
      %v2170 = vsel %vm2151, %v1970, 0.0
      %v2171 = vsel %vm2151, %v1971, 0.0
      %v2172 = vadd.f32 %v2170, %v2171
      %v2173 = vrot.slane %v2172, 4
      %v2174 = vadd.f32 %v2172, %v2173
      %v2175 = vrot.slane %v2174, 2
      %v2176 = vadd.f32 %v2174, %v2175
      %v2177 = vrot.slane %v2176, 1
      %v2178 = vadd.f32 %v2176, %v2177
      %v2179 = vsel %vm2151, %v1972, 0.0
      %v2180 = vsel %vm2151, %v1973, 0.0
      %v2181 = vadd.f32 %v2179, %v2180
      %v2182 = vrot.slane %v2181, 4
      %v2183 = vadd.f32 %v2181, %v2182
      %v2184 = vrot.slane %v2183, 2
      %v2185 = vadd.f32 %v2183, %v2184
      %v2186 = vrot.slane %v2185, 1
      %v2187 = vadd.f32 %v2185, %v2186
      %v2188 = vsel %vm2151, %v1974, 0.0
      %v2189 = vsel %vm2151, %v1975, 0.0
      %v2190 = vadd.f32 %v2188, %v2189
      %v2191 = vrot.slane %v2190, 4
      %v2192 = vadd.f32 %v2190, %v2191
      %v2193 = vrot.slane %v2192, 2
      %v2194 = vadd.f32 %v2192, %v2193
      %v2195 = vrot.slane %v2194, 1
      %v2196 = vadd.f32 %v2194, %v2195
      %v2197 = vsel %vm2151, %v1976, 0.0
      %v2198 = vsel %vm2151, %v1977, 0.0
      %v2199 = vadd.f32 %v2197, %v2198
      %v2200 = vrot.slane %v2199, 4
      %v2201 = vadd.f32 %v2199, %v2200
      %v2202 = vrot.slane %v2201, 2
      %v2203 = vadd.f32 %v2201, %v2202
      %v2204 = vrot.slane %v2203, 1
      %v2205 = vadd.f32 %v2203, %v2204
      %v2206 = vsel %vm2151, %v1978, 0.0
      %v2207 = vsel %vm2151, %v1979, 0.0
      %v2208 = vadd.f32 %v2206, %v2207
      %v2209 = vrot.slane %v2208, 4
      %v2210 = vadd.f32 %v2208, %v2209
      %v2211 = vrot.slane %v2210, 2
      %v2212 = vadd.f32 %v2210, %v2211
      %v2213 = vrot.slane %v2212, 1
      %v2214 = vadd.f32 %v2212, %v2213
      %v2215 = vsel %vm2151, %v1980, 0.0
      %v2216 = vsel %vm2151, %v1981, 0.0
      %v2217 = vadd.f32 %v2215, %v2216
      %v2218 = vrot.slane %v2217, 4
      %v2219 = vadd.f32 %v2217, %v2218
      %v2220 = vrot.slane %v2219, 2
      %v2221 = vadd.f32 %v2219, %v2220
      %v2222 = vrot.slane %v2221, 1
      %v2223 = vadd.f32 %v2221, %v2222
      %vm2224 = vcmask 261368
      %v2225 = vsel %vm2224, %v2062, 0.0
      %v2226 = vsel %vm2224, %v2063, 0.0
      %v2227 = vadd.f32 %v2225, %v2226
      %v2228 = vrot.slane %v2227, 4
      %v2229 = vadd.f32 %v2227, %v2228
      %v2230 = vrot.slane %v2229, 2
      %v2231 = vadd.f32 %v2229, %v2230
      %v2232 = vrot.slane %v2231, 1
      %v2233 = vadd.f32 %v2231, %v2232
      %v2234 = vsel %vm2224, %v2064, 0.0
      %v2235 = vsel %vm2224, %v2065, 0.0
      %v2236 = vadd.f32 %v2234, %v2235
      %v2237 = vrot.slane %v2236, 4
      %v2238 = vadd.f32 %v2236, %v2237
      %v2239 = vrot.slane %v2238, 2
      %v2240 = vadd.f32 %v2238, %v2239
      %v2241 = vrot.slane %v2240, 1
      %v2242 = vadd.f32 %v2240, %v2241
      %v2243 = vsel %vm2224, %v2066, 0.0
      %v2244 = vsel %vm2224, %v2067, 0.0
      %v2245 = vadd.f32 %v2243, %v2244
      %v2246 = vrot.slane %v2245, 4
      %v2247 = vadd.f32 %v2245, %v2246
      %v2248 = vrot.slane %v2247, 2
      %v2249 = vadd.f32 %v2247, %v2248
      %v2250 = vrot.slane %v2249, 1
      %v2251 = vadd.f32 %v2249, %v2250
      %v2252 = vsel %vm2224, %v2068, 0.0
      %v2253 = vsel %vm2224, %v2069, 0.0
      %v2254 = vadd.f32 %v2252, %v2253
      %v2255 = vrot.slane %v2254, 4
      %v2256 = vadd.f32 %v2254, %v2255
      %v2257 = vrot.slane %v2256, 2
      %v2258 = vadd.f32 %v2256, %v2257
      %v2259 = vrot.slane %v2258, 1
      %v2260 = vadd.f32 %v2258, %v2259
      %v2261 = vsel %vm2224, %v2070, 0.0
      %v2262 = vsel %vm2224, %v2071, 0.0
      %v2263 = vadd.f32 %v2261, %v2262
      %v2264 = vrot.slane %v2263, 4
      %v2265 = vadd.f32 %v2263, %v2264
      %v2266 = vrot.slane %v2265, 2
      %v2267 = vadd.f32 %v2265, %v2266
      %v2268 = vrot.slane %v2267, 1
      %v2269 = vadd.f32 %v2267, %v2268
      %v2270 = vsel %vm2224, %v2072, 0.0
      %v2271 = vsel %vm2224, %v2073, 0.0
      %v2272 = vadd.f32 %v2270, %v2271
      %v2273 = vrot.slane %v2272, 4
      %v2274 = vadd.f32 %v2272, %v2273
      %v2275 = vrot.slane %v2274, 2
      %v2276 = vadd.f32 %v2274, %v2275
      %v2277 = vrot.slane %v2276, 1
      %v2278 = vadd.f32 %v2276, %v2277
      %v2279 = vsel %vm2224, %v2074, 0.0
      %v2280 = vsel %vm2224, %v2075, 0.0
      %v2281 = vadd.f32 %v2279, %v2280
      %v2282 = vrot.slane %v2281, 4
      %v2283 = vadd.f32 %v2281, %v2282
      %v2284 = vrot.slane %v2283, 2
      %v2285 = vadd.f32 %v2283, %v2284
      %v2286 = vrot.slane %v2285, 1
      %v2287 = vadd.f32 %v2285, %v2286
      %v2288 = vsel %vm2224, %v2076, 0.0
      %v2289 = vsel %vm2224, %v2077, 0.0
      %v2290 = vadd.f32 %v2288, %v2289
      %v2291 = vrot.slane %v2290, 4
      %v2292 = vadd.f32 %v2290, %v2291
      %v2293 = vrot.slane %v2292, 2
      %v2294 = vadd.f32 %v2292, %v2293
      %v2295 = vrot.slane %v2294, 1
      %v2296 = vadd.f32 %v2294, %v2295
      %vm2297 = vcmp.eq.s32.totalorder %v284, 0
      %v2298 = vsel %vm2297, 1, 0
      %vm2299 = vcmp.eq.s32.totalorder %v2298, 1
      %v2300 = vlaneseq
      %v2301 = vshrl.u32 %v2300, 7
      %v2302 = vsub.s32 0, %v2301
      %v2303 = vrot.slane %v1680, %v2302
      %v2304 = vsel %vm2299, %v2303, 0.0
      %v2306 = vrot.slane %v2304, 1
      %v2307 = vrot.slane %v2304, 2
      %v2308 = vrot.slane %v2304, 3
      %v2309 = vrot.slane %v2304, 4
      %v2310 = vrot.slane %v2304, 5
      %v2311 = vrot.slane %v2304, 6
      %v2312 = vrot.slane %v2304, 7
      %v2321 = vadd.f32 %v2087, %v2304
      %v2322 = vadd.f32 %v2096, %v2306
      %v2323 = vadd.f32 %v2105, %v2307
      %v2324 = vadd.f32 %v2114, %v2308
      %v2325 = vadd.f32 %v2123, %v2309
      %v2326 = vadd.f32 %v2132, %v2310
      %v2327 = vadd.f32 %v2141, %v2311
      %v2328 = vadd.f32 %v2150, %v2312
      %vm2329 = vcmp.eq.s32.totalorder %v284, 7
      %v2330 = vsel %vm2329, 1, 0
      %vm2331 = vcmp.eq.s32.totalorder %v2330, 1
      %v2332 = vlaneseq
      %v2333 = vshrl.u32 %v2332, 7
      %v2334 = vsub.s32 7, %v2333
      %v2335 = vrot.slane %v1713, %v2334
      %v2336 = vsel %vm2331, %v2335, 0.0
      %v2338 = vrot.slane %v2336, 1
      %v2339 = vrot.slane %v2336, 2
      %v2340 = vrot.slane %v2336, 3
      %v2341 = vrot.slane %v2336, 4
      %v2342 = vrot.slane %v2336, 5
      %v2343 = vrot.slane %v2336, 6
      %v2344 = vrot.slane %v2336, 7
      %v2353 = vadd.f32 %v2321, %v2336
      %v2354 = vadd.f32 %v2322, %v2338
      %v2355 = vadd.f32 %v2323, %v2339
      %v2356 = vadd.f32 %v2324, %v2340
      %v2357 = vadd.f32 %v2325, %v2341
      %v2358 = vadd.f32 %v2326, %v2342
      %v2359 = vadd.f32 %v2327, %v2343
      %v2360 = vadd.f32 %v2328, %v2344
      %v2361 = vsel %vm1646, 1, 0
      %vm2362 = vcmp.eq.s32.totalorder %v2361, 1
      %2364 = vset.pattern.permute.xlu0 0
      %2365 = vperm.xlu0 %2364, %v2160
      %v2366 = vpop.permute.xlu0 %2365
      %2368 = vset.pattern.permute.xlu0 0
      %2369 = vperm.xlu0 %2368, %v2169
      %v2370 = vpop.permute.xlu0 %2369
      %2372 = vset.pattern.permute.xlu0 0
      %2373 = vperm.xlu0 %2372, %v2178
      %v2374 = vpop.permute.xlu0 %2373
      %2376 = vset.pattern.permute.xlu0 0
      %2377 = vperm.xlu0 %2376, %v2187
      %v2378 = vpop.permute.xlu0 %2377
      %2380 = vset.pattern.permute.xlu0 0
      %2381 = vperm.xlu0 %2380, %v2196
      %v2382 = vpop.permute.xlu0 %2381
      %2384 = vset.pattern.permute.xlu0 0
      %2385 = vperm.xlu0 %2384, %v2205
      %v2386 = vpop.permute.xlu0 %2385
      %2388 = vset.pattern.permute.xlu0 0
      %2389 = vperm.xlu0 %2388, %v2214
      %v2390 = vpop.permute.xlu0 %2389
      %2392 = vset.pattern.permute.xlu0 0
      %2393 = vperm.xlu0 %2392, %v2223
      %v2394 = vpop.permute.xlu0 %2393
      %vm2395 = vcmask 1041409
      %v2396 = vsel %vm2395, %v2370, %v2366
      %vm2397 = vcmask 1042434
      %v2398 = vsel %vm2397, %v2374, %v2396
      %vm2399 = vcmask 1043459
      %v2400 = vsel %vm2399, %v2378, %v2398
      %vm2401 = vcmask 1044484
      %v2402 = vsel %vm2401, %v2382, %v2400
      %vm2403 = vcmask 1045509
      %v2404 = vsel %vm2403, %v2386, %v2402
      %vm2405 = vcmask 1046534
      %v2406 = vsel %vm2405, %v2390, %v2404
      %vm2407 = vcmask 1047559
      %v2408 = vsel %vm2407, %v2394, %v2406
      %v2410 = vsel %vm2362, %v2408, 0.0
      %v2412 = vrot.slane %v2410, 1
      %v2413 = vrot.slane %v2410, 2
      %v2414 = vrot.slane %v2410, 3
      %v2415 = vrot.slane %v2410, 4
      %v2416 = vrot.slane %v2410, 5
      %v2417 = vrot.slane %v2410, 6
      %v2418 = vrot.slane %v2410, 7
      %v2427 = vadd.f32 %v2353, %v2410
      %v2428 = vadd.f32 %v2354, %v2412
      %v2429 = vadd.f32 %v2355, %v2413
      %v2430 = vadd.f32 %v2356, %v2414
      %v2431 = vadd.f32 %v2357, %v2415
      %v2432 = vadd.f32 %v2358, %v2416
      %v2433 = vadd.f32 %v2359, %v2417
      %v2434 = vadd.f32 %v2360, %v2418
      %v2435 = vsel %vm1647, 1, 0
      %vm2436 = vcmp.eq.s32.totalorder %v2435, 1
      %2438 = vset.pattern.permute.xlu0 31
      %2439 = vperm.xlu0 %2438, %v2233
      %v2440 = vpop.permute.xlu0 %2439
      %2442 = vset.pattern.permute.xlu0 31
      %2443 = vperm.xlu0 %2442, %v2242
      %v2444 = vpop.permute.xlu0 %2443
      %2446 = vset.pattern.permute.xlu0 31
      %2447 = vperm.xlu0 %2446, %v2251
      %v2448 = vpop.permute.xlu0 %2447
      %2450 = vset.pattern.permute.xlu0 31
      %2451 = vperm.xlu0 %2450, %v2260
      %v2452 = vpop.permute.xlu0 %2451
      %2454 = vset.pattern.permute.xlu0 31
      %2455 = vperm.xlu0 %2454, %v2269
      %v2456 = vpop.permute.xlu0 %2455
      %2458 = vset.pattern.permute.xlu0 31
      %2459 = vperm.xlu0 %2458, %v2278
      %v2460 = vpop.permute.xlu0 %2459
      %2462 = vset.pattern.permute.xlu0 31
      %2463 = vperm.xlu0 %2462, %v2287
      %v2464 = vpop.permute.xlu0 %2463
      %2466 = vset.pattern.permute.xlu0 31
      %2467 = vperm.xlu0 %2466, %v2296
      %v2468 = vpop.permute.xlu0 %2467
      %v2469 = vsel %vm2395, %v2444, %v2440
      %v2470 = vsel %vm2397, %v2448, %v2469
      %v2471 = vsel %vm2399, %v2452, %v2470
      %v2472 = vsel %vm2401, %v2456, %v2471
      %v2473 = vsel %vm2403, %v2460, %v2472
      %v2474 = vsel %vm2405, %v2464, %v2473
      %v2475 = vsel %vm2407, %v2468, %v2474
      %v2477 = vsel %vm2436, %v2475, 0.0
      %v2479 = vrot.slane %v2477, 1
      %v2480 = vrot.slane %v2477, 2
      %v2481 = vrot.slane %v2477, 3
      %v2482 = vrot.slane %v2477, 4
      %v2483 = vrot.slane %v2477, 5
      %v2484 = vrot.slane %v2477, 6
      %v2485 = vrot.slane %v2477, 7
      %v2494 = vadd.f32 %v2427, %v2477
      %v2495 = vadd.f32 %v2428, %v2479
      %v2496 = vadd.f32 %v2429, %v2480
      %v2497 = vadd.f32 %v2430, %v2481
      %v2498 = vadd.f32 %v2431, %v2482
      %v2499 = vadd.f32 %v2432, %v2483
      %v2500 = vadd.f32 %v2433, %v2484
      %v2501 = vadd.f32 %v2434, %v2485
      %v2502 = vpack.c.bf16 %v2494, %v2494
      %v2503 = vpack.c.bf16 %v2495, %v2495
      %v2504 = vpack.c.bf16 %v2496, %v2496
      %v2505 = vpack.c.bf16 %v2497, %v2497
      %v2506 = vpack.c.bf16 %v2498, %v2498
      %v2507 = vpack.c.bf16 %v2499, %v2499
      %v2508 = vpack.c.bf16 %v2500, %v2500
      %v2509 = vpack.c.bf16 %v2501, %v2501
      %v2510 = vld [vmem:[%s2] sm:$0xf]
      %v2511 = vld [vmem:[%s2 + $0x4] sm:$0xf]
      %v2512 = vld [vmem:[%s2 + $0x8] sm:$0xf]
      %v2513 = vld [vmem:[%s2 + $0xc] sm:$0xf]
      %v2522 = vunpack.c.l.b16 %v2502
      %v2523 = vunpack.c.l.b16 %v2503
      %v2524 = vunpack.c.l.b16 %v2504
      %v2525 = vunpack.c.l.b16 %v2505
      %v2526 = vunpack.c.l.b16 %v2506
      %v2527 = vunpack.c.l.b16 %v2507
      %v2528 = vunpack.c.l.b16 %v2508
      %v2529 = vunpack.c.l.b16 %v2509
      %v2530 = vrot.slane %v2523, 7
      %v2531 = vsel %vm2395, %v2530, %v2522
      %v2532 = vrot.slane %v2524, 6
      %v2533 = vsel %vm2397, %v2532, %v2531
      %v2534 = vrot.slane %v2525, 5
      %v2535 = vsel %vm2399, %v2534, %v2533
      %v2536 = vrot.slane %v2526, 4
      %v2537 = vsel %vm2401, %v2536, %v2535
      %v2538 = vrot.slane %v2527, 3
      %v2539 = vsel %vm2403, %v2538, %v2537
      %v2540 = vrot.slane %v2528, 2
      %v2541 = vsel %vm2405, %v2540, %v2539
      %v2542 = vrot.slane %v2529, 1
      %v2543 = vsel %vm2407, %v2542, %v2541
      %v2544 = vpack.c.b16 %v2543, %v2543
      %v2549 = vunpack.c.l.b16 %v2510
      %v2550 = vunpack.c.l.b16 %v2511
      %v2551 = vunpack.c.l.b16 %v2512
      %v2552 = vunpack.c.l.b16 %v2513
      %v2553 = vpack.c.b16 %v2550, %v2549
      %v2554 = vpack.c.b16 %v2552, %v2551
      %v2558 = vsel %vm2078, %v2544, 0
      %2560 = vmatprep.subr.bf16.mxu0 0
      %2561 = vmatpush1.bf16.msra.mxu0 %v2553
      %2562 = vmatprep.subr.bf16.mxu0 0
      %2563 = vmatpush1.bf16.msra.mxu0 %v2554
      %2564 = vmatprep.subr.bf16.mxu0 0
      %2565 = vmatpush1.bf16.msra.mxu0 0
      %2566 = vmatprep.subr.bf16.mxu0 0
      %2567 = vmatpush1.bf16.msra.mxu0 0
      %2568 = vmatprep.subr.bf16.mxu0 0
      %2569 = vmatpush1.bf16.msra.mxu0 0
      %2570 = vmatprep.subr.bf16.mxu0 0
      %2571 = vmatpush1.bf16.msra.mxu0 0
      %2572 = vmatprep.subr.bf16.mxu0 0
      %2573 = vmatpush1.bf16.msra.mxu0 0
      %2574 = vmatprep.subr.bf16.mxu0 0
      %2575 = vmatpush1.bf16.msra.mxu0 0
      %2576 = vmatprep.subr.bf16.mxu0 0
      %2577 = vmatpush1.bf16.msra.mxu0 0
      %2578 = vmatprep.subr.bf16.mxu0 0
      %2579 = vmatpush1.bf16.msra.mxu0 0
      %2580 = vmatprep.subr.bf16.mxu0 0
      %2581 = vmatpush1.bf16.msra.mxu0 0
      %2582 = vmatprep.subr.bf16.mxu0 0
      %2583 = vmatpush1.bf16.msra.mxu0 0
      %2584 = vmatprep.subr.bf16.mxu0 0
      %2585 = vmatpush1.bf16.msra.mxu0 0
      %2586 = vmatprep.subr.bf16.mxu0 0
      %2587 = vmatpush1.bf16.msra.mxu0 0
      %2588 = vmatprep.subr.bf16.mxu0 0
      %2589 = vmatpush1.bf16.msra.mxu0 0
      %2590 = vmatprep.subr.bf16.mxu0 0
      %2591 = vmatpush1.bf16.msra.mxu0 0
      %2592 = vmatprep.mubr.bf16.mxu0 0
      %2593 = vmatmul.mubr.bf16.gmra.mrb[0].mxu0 %v2558
      %v2594 = vpop.f32.mrb[0].mxu0
      %v2595 = vadd.f32 0.0, %v2594
      %v2596 = vpop.f32.mrb[0].mxu0
      %v2597 = vpop.f32.mrb[0].mxu0
      %v2598 = vpop.f32.mrb[0].mxu0
      %2599 = vdwg.mxu0
      %vm2600 = vcmask 15360
      %2601 = vst.msk [vmem:[%s232] sm:$0xff] %vm2600, %v2595
      %p2602 = scmp.lt.s32.totalorder %s18, 1
      %s2603 = scalar_select %p2602, %s18, 1
      %p2604 = scmp.lt.s32.totalorder %s19, 0
      %s2605 = scalar_select %p2604, %s19, 0
      %s2606 = sadd.s32 %s2605, %s2603
      %s2607 = smul.addr %s2606, 8
      %s2608 = scalar_lea.vmem %s3, %s2607
      // Predicated region
      $region33: #{tpu_custom_call.1} parent=31 // pred_check
        %p2609 = pneg %p123
      $region34: #{tpu_custom_call.1} parent=31 // pred_check_branch
        %2611 = sbr.rel (%p2609) target = $region36
      $region35: #{tpu_custom_call.1} parent=31 // pred_region
        _
      $region36: #{tpu_custom_call.1} parent=31 // pred_fallthru
        _
    $region32: #{tpu_custom_call.1} parent=5 // pred_fallthru
      _
    %p2612 = scmp.le.s32.totalorder 2, %s9
    // Predicated region
    $region37: #{tpu_custom_call.1} parent=5 // pred_check
      %p2613 = pneg %p2612
    $region38: #{tpu_custom_call.1} parent=5 // pred_check_branch
      %2615 = sbr.rel (%p2613) target = $region40
    $region39: #{tpu_custom_call.1} parent=5 // pred_region
      %s2616 = ssub.s32 %s9, 2
      // Predicated region
      $region41: #{tpu_custom_call.1} parent=39 // pred_check
        %p2617 = pneg %p129
      $region42: #{tpu_custom_call.1} parent=39 // pred_check_branch
        %2619 = sbr.rel (%p2617) target = $region44
      $region43: #{tpu_custom_call.1} parent=39 // pred_region
        %p2620 = scmp.lt.s32.totalorder %s20, 1
        %s2621 = scalar_select %p2620, %s20, 1
        %p2622 = scmp.lt.s32.totalorder %s21, 0
        %s2623 = scalar_select %p2622, %s21, 0
        %s2624 = sadd.s32 %s2623, %s2621
        %s2625 = smul.addr %s2624, 8
        %s2626 = scalar_lea.vmem %s3, %s2625
      $region44: #{tpu_custom_call.1} parent=39 // pred_fallthru
        _
    $region40: #{tpu_custom_call.1} parent=5 // pred_fallthru
      _
  $region6: #{tpu_custom_call.1} parent=0 // loop_footer
    %s13 = sadd.s32 1, %s9
  $region7: #{tpu_custom_call.1} parent=0 // loop_footer_branch
    %8 = sbr.rel target = $region3
  $region8: #{tpu_custom_call.1} parent=0 // loop_exit
    _

</llo_original>
